<compile_context>
chip_gen: v7x
topology: tpu7x:2x2x1
jax: 0.10.0
libtpu: 0.0.40
codegen_flags: <defaults>
</compile_context>

<pallas_src>
import math

import jax
import jax.numpy as jnp
import numpy as np
from jax.experimental import pallas as pl
from jax.experimental.pallas import tpu as pltpu


# ----------------------------- configuration -----------------------------
LAYERS = [2, 32, 32, 32, 1]          # [D_in, H, H, H, D_out] -- PINN-style net
H = LAYERS[1]
NUM_MID = len(LAYERS) - 3            # hidden->hidden layers used inside the loop
TM = 512                             # batch columns (lanes) per grid step
CHUNK = 128                          # lane chunk for MXU/EUP interleave


# ------------------------------- the kernel ------------------------------
def net_attention_kernel(x_ref,                 # (D_in+1, TM)  rows: [x0, x1, 1]
                         wcat_ref,              # (3H, D_in+1)  = [W0;WA1;WA2 | b]
                         wmid_ref, bmid_ref,    # (NUM_MID,H,H), (NUM_MID,H,1)
                         wlast_ref, blast_ref,  # (D_out,H), (D_out,1)
                         out_ref):              # (D_out, TM)
    # hoist tiny weight loads out of the chunk loop
    wcat = wcat_ref[...]                                   # (3H, D_in+1)
    wmid = [wmid_ref[i] for i in range(NUM_MID)]           # each (H, H)
    bmid = [bmid_ref[i] for i in range(NUM_MID)]           # each (H, 1)
    wlast = wlast_ref[...]                                 # (D_out, H)
    blast = blast_ref[...]                                 # (D_out, 1)

    tm = x_ref.shape[1]
    n_chunks = tm // CHUNK

    # Lane chunks are fully independent dataflows -> scheduler can overlap
    # chunk k's EUP tanh with chunk k+1's MXU matmuls.
    for c in range(n_chunks):
        lo, hi = c * CHUNK, (c + 1) * CHUNK
        x = x_ref[:, lo:hi]                                # (D_in+1, CHUNK)

        # Fused front layers [L0; A1; A2] with bias folded via the ones row.
        h = jnp.tanh(jnp.dot(wcat, x,
                             preferred_element_type=jnp.float32))   # (3H, CHUNK)
        a  = h[0:H, :]
        e1 = h[H:2 * H, :]
        e2 = h[2 * H:3 * H, :]

        # a*e1 + (1-a)*e2  ==  e2 + a*(e1-e2)
        d = e1 - e2
        a = e2 + a * d

        for i in range(NUM_MID):
            z = (jnp.dot(wmid[i], a, preferred_element_type=jnp.float32)
                 + bmid[i])                                # (H, CHUNK)
            a = jnp.tanh(z)
            a = e2 + a * d

        out_ref[:, lo:hi] = (jnp.dot(wlast, a,
                                     preferred_element_type=jnp.float32)
                             + blast)                      # (D_out, CHUNK)


# ------------------------- parameter packing (once) ------------------------
def pack_params(p):
    """Pack PyTorch-layout (out, in) params for the kernel. Call once per
    parameter update, NOT per forward."""
    wcat = jnp.concatenate([p["w0"], p["wa1"], p["wa2"]], axis=0)     # (3H, D_in)
    bcat = jnp.concatenate([p["b0"], p["ba1"], p["ba2"]], axis=0)     # (3H,)
    wcat_aug = jnp.concatenate([wcat, bcat[:, None]], axis=1)         # (3H, D_in+1)
    return {
        "wcat_aug": wcat_aug,
        "wmid": p["wmid"],                                            # (NUM_MID,H,H)
        "bmid": p["bmid"].reshape(NUM_MID, H, 1),
        "wlast": p["wlast"],                                          # (D_out,H)
        "blast": p["blast"].reshape(LAYERS[-1], 1),
    }


# ------------------------------- the wrapper ------------------------------
@jax.jit
def net_attention(x, packed):
    """x: (N, D_in) float32. packed: output of pack_params()."""
    N, d_in = x.shape
    d_out = LAYERS[-1]
    tm = TM
    assert tm % CHUNK == 0

    # transposed, lane-dense layout: batch on the lane axis, plus a ones row
    # so the front bias rides through the MXU contraction.
    x_aug = jnp.concatenate([x.T, jnp.ones((1, N), jnp.float32)], axis=0)  # (D_in+1, N)
    n_pad = ((N + tm - 1) // tm) * tm
    if n_pad != N:
        x_aug = jnp.pad(x_aug, ((0, 0), (0, n_pad - N)))

    full2 = lambda: pl.BlockSpec(None, lambda i: (0, 0))
    full3 = lambda: pl.BlockSpec(None, lambda i: (0, 0, 0))

    grid_spec = pltpu.PrefetchScalarGridSpec(
        num_scalar_prefetch=0,
        grid=(n_pad // tm,),
        in_specs=[
            pl.BlockSpec((d_in + 1, tm), lambda i: (0, i)),   # x tile (lanes = batch)
            full2(),                                          # wcat_aug
            full3(), full3(),                                 # wmid, bmid
            full2(), full2(),                                 # wlast, blast
        ],
        out_specs=pl.BlockSpec((d_out, tm), lambda i: (0, i)),
    )

    out_t = pl.pallas_call(
        net_attention_kernel,
        out_shape=jax.ShapeDtypeStruct((d_out, n_pad), jnp.float32),
        grid_spec=grid_spec,
        compiler_params=pltpu.CompilerParams(
            dimension_semantics=("parallel",)),
    )(x_aug, packed["wcat_aug"], packed["wmid"], packed["bmid"],
      packed["wlast"], packed["blast"])

    return out_t[:, :N].T                                     # (N, D_out)


# -------------------------- deterministic params --------------------------
def xavier_normal(key, fan_out, fan_in):
    # matches torch.nn.init.xavier_normal_ (gain=1.0); stored as (out, in)
    std = math.sqrt(2.0 / (fan_in + fan_out))
    return std * jax.random.normal(key, (fan_out, fan_in), dtype=jnp.float32)


def init_params(key):
    d_in, d_out = LAYERS[0], LAYERS[-1]
    keys = jax.random.split(key, 4 + NUM_MID + 5)

    w0 = xavier_normal(keys[0], H, d_in)
    wa1 = xavier_normal(keys[1], H, d_in)
    wa2 = xavier_normal(keys[2], H, d_in)
    wmid = jnp.stack([xavier_normal(keys[3 + i], H, H) for i in range(NUM_MID)])
    wlast = xavier_normal(keys[3 + NUM_MID], d_out, H)

    # NOTE: the PyTorch module zero-inits biases; the test uses small NONZERO
    # random biases so a bias-packing bug cannot slip through unnoticed.
    kb = keys[4 + NUM_MID:]
    s = 0.1
    return {
        "w0": w0,   "b0":  s * jax.random.normal(kb[0], (H,), jnp.float32),
        "wa1": wa1, "ba1": s * jax.random.normal(kb[1], (H,), jnp.float32),
        "wa2": wa2, "ba2": s * jax.random.normal(kb[2], (H,), jnp.float32),
        "wmid": wmid,
        "bmid": s * jax.random.normal(kb[3], (NUM_MID, H), jnp.float32),
        "wlast": wlast,
        "blast": s * jax.random.normal(kb[4], (d_out,), jnp.float32),
    }


# ------------------------------ pure-JAX ref -------------------------------
def net_attention_ref(x, p):
    a = jnp.tanh(x @ p["w0"].T + p["b0"])
    e1 = jnp.tanh(x @ p["wa1"].T + p["ba1"])
    e2 = jnp.tanh(x @ p["wa2"].T + p["ba2"])
    a = a * e1 + (1.0 - a) * e2
    for i in range(NUM_MID):
        a = jnp.tanh(a @ p["wmid"][i].T + p["bmid"][i])
        a = a * e1 + (1.0 - a) * e2
    return a @ p["wlast"].T + p["blast"]


# ---------------------------------- main -----------------------------------
if __name__ == "__main__":
    key = jax.random.PRNGKey(0)
    k_x, k_p = jax.random.split(key)

    N = 1024  # 2 grid steps at TM=512 -> both v7x TensorCores fed; fine on 1-TC chips
    x = jax.random.normal(k_x, (N, LAYERS[0]), dtype=jnp.float32)
    params = init_params(k_p)
    packed = pack_params(params)      # packed once, outside the forward path

    out = net_attention(x, packed)
    out = jax.block_until_ready(out)

    ref = net_attention_ref(x, params)
    # Tolerance covers the bias-fold column going through the MXU's bf16
    # operand rounding (bounded ~2e-4/layer); a packing bug would be O(0.1).
    np.testing.assert_allclose(np.asarray(out), np.asarray(ref),
                               rtol=5e-3, atol=5e-3)

    print("KERNEL_OK")
</pallas_src>

<mosaic_0001>
module attributes {stable_mosaic.version = 11 : i64} {
  func.func @net_attention_kernel(%arg0: i32, %arg1: memref<3x512xf32, #tpu.memory_space<vmem>>, %arg2: memref<96x3xf32, #tpu.memory_space<vmem>>, %arg3: memref<2x32x32xf32, #tpu.memory_space<vmem>>, %arg4: memref<2x32x1xf32, #tpu.memory_space<vmem>>, %arg5: memref<1x32xf32, #tpu.memory_space<vmem>>, %arg6: memref<1x1xf32, #tpu.memory_space<vmem>>, %arg7: memref<1x512xf32, #tpu.memory_space<vmem>>) attributes {dimension_semantics = [#tpu.dimension_semantics<parallel>], iteration_bounds = array<i64: 2>, scalar_prefetch = 0 : i64, scratch_operands = 0 : i64, tpu.core_type = #tpu.core_type<tc>, window_params = [{transform_indices = @transform_0, window_bounds = array<i64: 3, 512>}, {pipeline_mode = #tpu.pipeline_mode<synchronous>, transform_indices = @transform_1, window_bounds = array<i64: 96, 3>}, {pipeline_mode = #tpu.pipeline_mode<synchronous>, transform_indices = @transform_2, window_bounds = array<i64: 2, 32, 32>}, {pipeline_mode = #tpu.pipeline_mode<synchronous>, transform_indices = @transform_3, window_bounds = array<i64: 2, 32, 1>}, {pipeline_mode = #tpu.pipeline_mode<synchronous>, transform_indices = @transform_4, window_bounds = array<i64: 1, 32>}, {pipeline_mode = #tpu.pipeline_mode<synchronous>, transform_indices = @transform_5, window_bounds = array<i64: 1, 1>}, {transform_indices = @transform_6, window_bounds = array<i64: 1, 512>}]} {
    %c0 = arith.constant 0 : index
    %c0_0 = arith.constant 0 : index
    %0 = vector.load %arg2[%c0, %c0_0] : memref<96x3xf32, #tpu.memory_space<vmem>>, vector<96x3xf32>
    %c0_1 = arith.constant 0 : index
    %c0_2 = arith.constant 0 : index
    %c0_3 = arith.constant 0 : index
    %1 = vector.load %arg3[%c0_1, %c0_2, %c0_3] : memref<2x32x32xf32, #tpu.memory_space<vmem>>, vector<1x32x32xf32>
    %2 = vector.shape_cast %1 : vector<1x32x32xf32> to vector<32x32xf32>
    %c1 = arith.constant 1 : index
    %c0_4 = arith.constant 0 : index
    %c0_5 = arith.constant 0 : index
    %3 = vector.load %arg3[%c1, %c0_4, %c0_5] : memref<2x32x32xf32, #tpu.memory_space<vmem>>, vector<1x32x32xf32>
    %4 = vector.shape_cast %3 : vector<1x32x32xf32> to vector<32x32xf32>
    %c0_6 = arith.constant 0 : index
    %c0_7 = arith.constant 0 : index
    %c0_8 = arith.constant 0 : index
    %5 = vector.load %arg4[%c0_6, %c0_7, %c0_8] : memref<2x32x1xf32, #tpu.memory_space<vmem>>, vector<1x32x1xf32>
    %6 = vector.shape_cast %5 : vector<1x32x1xf32> to vector<32x1xf32>
    %c1_9 = arith.constant 1 : index
    %c0_10 = arith.constant 0 : index
    %c0_11 = arith.constant 0 : index
    %7 = vector.load %arg4[%c1_9, %c0_10, %c0_11] : memref<2x32x1xf32, #tpu.memory_space<vmem>>, vector<1x32x1xf32>
    %8 = vector.shape_cast %7 : vector<1x32x1xf32> to vector<32x1xf32>
    %c0_12 = arith.constant 0 : index
    %c0_13 = arith.constant 0 : index
    %9 = vector.load %arg5[%c0_12, %c0_13] : memref<1x32xf32, #tpu.memory_space<vmem>>, vector<1x32xf32>
    %c0_14 = arith.constant 0 : index
    %c0_15 = arith.constant 0 : index
    %10 = vector.load %arg6[%c0_14, %c0_15] : memref<1x1xf32, #tpu.memory_space<vmem>>, vector<1x1xf32>
    %c0_16 = arith.constant 0 : index
    %c0_17 = arith.constant 0 : index
    %11 = vector.load %arg1[%c0_16, %c0_17] : memref<3x512xf32, #tpu.memory_space<vmem>>, vector<3x128xf32>
    %cst = arith.constant dense<0.000000e+00> : vector<96x128xf32>
    %12 = tpu.matmul %0, %11, %cst {dimension_numbers = #tpu.dot_dimension_numbers<[1], [0], [0], [1], [0, 0, 1, 1], [], []>} : vector<96x3xf32>, vector<3x128xf32>, vector<96x128xf32> -> vector<96x128xf32>
    %13 = math.tanh %12 : vector<96x128xf32>
    %14 = vector.extract_strided_slice %13 {offsets = [0, 0], sizes = [32, 128], strides = [1, 1]} : vector<96x128xf32> to vector<32x128xf32>
    %15 = vector.extract_strided_slice %13 {offsets = [32, 0], sizes = [32, 128], strides = [1, 1]} : vector<96x128xf32> to vector<32x128xf32>
    %16 = vector.extract_strided_slice %13 {offsets = [64, 0], sizes = [32, 128], strides = [1, 1]} : vector<96x128xf32> to vector<32x128xf32>
    %17 = arith.subf %15, %16 : vector<32x128xf32>
    %18 = arith.mulf %14, %17 : vector<32x128xf32>
    %19 = arith.addf %16, %18 : vector<32x128xf32>
    %cst_18 = arith.constant dense<0.000000e+00> : vector<32x128xf32>
    %20 = tpu.matmul %2, %19, %cst_18 {dimension_numbers = #tpu.dot_dimension_numbers<[1], [0], [0], [1], [0, 0, 1, 1], [], []>} : vector<32x32xf32>, vector<32x128xf32>, vector<32x128xf32> -> vector<32x128xf32>
    %21 = vector.broadcast %6 : vector<32x1xf32> to vector<32x128xf32>
    %22 = arith.addf %20, %21 : vector<32x128xf32>
    %23 = math.tanh %22 : vector<32x128xf32>
    %24 = arith.mulf %23, %17 : vector<32x128xf32>
    %25 = arith.addf %16, %24 : vector<32x128xf32>
    %cst_19 = arith.constant dense<0.000000e+00> : vector<32x128xf32>
    %26 = tpu.matmul %4, %25, %cst_19 {dimension_numbers = #tpu.dot_dimension_numbers<[1], [0], [0], [1], [0, 0, 1, 1], [], []>} : vector<32x32xf32>, vector<32x128xf32>, vector<32x128xf32> -> vector<32x128xf32>
    %27 = vector.broadcast %8 : vector<32x1xf32> to vector<32x128xf32>
    %28 = arith.addf %26, %27 : vector<32x128xf32>
    %29 = math.tanh %28 : vector<32x128xf32>
    %30 = arith.mulf %29, %17 : vector<32x128xf32>
    %31 = arith.addf %16, %30 : vector<32x128xf32>
    %cst_20 = arith.constant dense<0.000000e+00> : vector<1x128xf32>
    %32 = tpu.matmul %9, %31, %cst_20 {dimension_numbers = #tpu.dot_dimension_numbers<[1], [0], [0], [1], [0, 0, 1, 1], [], []>} : vector<1x32xf32>, vector<32x128xf32>, vector<1x128xf32> -> vector<1x128xf32>
    %33 = vector.broadcast %10 : vector<1x1xf32> to vector<1x128xf32>
    %34 = arith.addf %32, %33 : vector<1x128xf32>
    %c0_21 = arith.constant 0 : index
    %c0_22 = arith.constant 0 : index
    %35 = vector.load %arg7[%c0_21, %c0_22] : memref<1x512xf32, #tpu.memory_space<vmem>>, vector<1x128xf32>
    tpu.vector_store %arg7[%c0_21, %c0_22], %34 {strides = array<i32>} : memref<1x512xf32, #tpu.memory_space<vmem>>, vector<1x128xf32>,
    %c0_23 = arith.constant 0 : index
    %c128 = arith.constant 128 : index
    %36 = vector.load %arg1[%c0_23, %c128] : memref<3x512xf32, #tpu.memory_space<vmem>>, vector<3x128xf32>
    %cst_24 = arith.constant dense<0.000000e+00> : vector<96x128xf32>
    %37 = tpu.matmul %0, %36, %cst_24 {dimension_numbers = #tpu.dot_dimension_numbers<[1], [0], [0], [1], [0, 0, 1, 1], [], []>} : vector<96x3xf32>, vector<3x128xf32>, vector<96x128xf32> -> vector<96x128xf32>
    %38 = math.tanh %37 : vector<96x128xf32>
    %39 = vector.extract_strided_slice %38 {offsets = [0, 0], sizes = [32, 128], strides = [1, 1]} : vector<96x128xf32> to vector<32x128xf32>
    %40 = vector.extract_strided_slice %38 {offsets = [32, 0], sizes = [32, 128], strides = [1, 1]} : vector<96x128xf32> to vector<32x128xf32>
    %41 = vector.extract_strided_slice %38 {offsets = [64, 0], sizes = [32, 128], strides = [1, 1]} : vector<96x128xf32> to vector<32x128xf32>
    %42 = arith.subf %40, %41 : vector<32x128xf32>
    %43 = arith.mulf %39, %42 : vector<32x128xf32>
    %44 = arith.addf %41, %43 : vector<32x128xf32>
    %cst_25 = arith.constant dense<0.000000e+00> : vector<32x128xf32>
    %45 = tpu.matmul %2, %44, %cst_25 {dimension_numbers = #tpu.dot_dimension_numbers<[1], [0], [0], [1], [0, 0, 1, 1], [], []>} : vector<32x32xf32>, vector<32x128xf32>, vector<32x128xf32> -> vector<32x128xf32>
    %46 = vector.broadcast %6 : vector<32x1xf32> to vector<32x128xf32>
    %47 = arith.addf %45, %46 : vector<32x128xf32>
    %48 = math.tanh %47 : vector<32x128xf32>
    %49 = arith.mulf %48, %42 : vector<32x128xf32>
    %50 = arith.addf %41, %49 : vector<32x128xf32>
    %cst_26 = arith.constant dense<0.000000e+00> : vector<32x128xf32>
    %51 = tpu.matmul %4, %50, %cst_26 {dimension_numbers = #tpu.dot_dimension_numbers<[1], [0], [0], [1], [0, 0, 1, 1], [], []>} : vector<32x32xf32>, vector<32x128xf32>, vector<32x128xf32> -> vector<32x128xf32>
    %52 = vector.broadcast %8 : vector<32x1xf32> to vector<32x128xf32>
    %53 = arith.addf %51, %52 : vector<32x128xf32>
    %54 = math.tanh %53 : vector<32x128xf32>
    %55 = arith.mulf %54, %42 : vector<32x128xf32>
    %56 = arith.addf %41, %55 : vector<32x128xf32>
    %cst_27 = arith.constant dense<0.000000e+00> : vector<1x128xf32>
    %57 = tpu.matmul %9, %56, %cst_27 {dimension_numbers = #tpu.dot_dimension_numbers<[1], [0], [0], [1], [0, 0, 1, 1], [], []>} : vector<1x32xf32>, vector<32x128xf32>, vector<1x128xf32> -> vector<1x128xf32>
    %58 = vector.broadcast %10 : vector<1x1xf32> to vector<1x128xf32>
    %59 = arith.addf %57, %58 : vector<1x128xf32>
    %c0_28 = arith.constant 0 : index
    %c128_29 = arith.constant 128 : index
    %60 = vector.load %arg7[%c0_28, %c128_29] : memref<1x512xf32, #tpu.memory_space<vmem>>, vector<1x128xf32>
    tpu.vector_store %arg7[%c0_28, %c128_29], %59 {strides = array<i32>} : memref<1x512xf32, #tpu.memory_space<vmem>>, vector<1x128xf32>,
    %c0_30 = arith.constant 0 : index
    %c256 = arith.constant 256 : index
    %61 = vector.load %arg1[%c0_30, %c256] : memref<3x512xf32, #tpu.memory_space<vmem>>, vector<3x128xf32>
    %cst_31 = arith.constant dense<0.000000e+00> : vector<96x128xf32>
    %62 = tpu.matmul %0, %61, %cst_31 {dimension_numbers = #tpu.dot_dimension_numbers<[1], [0], [0], [1], [0, 0, 1, 1], [], []>} : vector<96x3xf32>, vector<3x128xf32>, vector<96x128xf32> -> vector<96x128xf32>
    %63 = math.tanh %62 : vector<96x128xf32>
    %64 = vector.extract_strided_slice %63 {offsets = [0, 0], sizes = [32, 128], strides = [1, 1]} : vector<96x128xf32> to vector<32x128xf32>
    %65 = vector.extract_strided_slice %63 {offsets = [32, 0], sizes = [32, 128], strides = [1, 1]} : vector<96x128xf32> to vector<32x128xf32>
    %66 = vector.extract_strided_slice %63 {offsets = [64, 0], sizes = [32, 128], strides = [1, 1]} : vector<96x128xf32> to vector<32x128xf32>
    %67 = arith.subf %65, %66 : vector<32x128xf32>
    %68 = arith.mulf %64, %67 : vector<32x128xf32>
    %69 = arith.addf %66, %68 : vector<32x128xf32>
    %cst_32 = arith.constant dense<0.000000e+00> : vector<32x128xf32>
    %70 = tpu.matmul %2, %69, %cst_32 {dimension_numbers = #tpu.dot_dimension_numbers<[1], [0], [0], [1], [0, 0, 1, 1], [], []>} : vector<32x32xf32>, vector<32x128xf32>, vector<32x128xf32> -> vector<32x128xf32>
    %71 = vector.broadcast %6 : vector<32x1xf32> to vector<32x128xf32>
    %72 = arith.addf %70, %71 : vector<32x128xf32>
    %73 = math.tanh %72 : vector<32x128xf32>
    %74 = arith.mulf %73, %67 : vector<32x128xf32>
    %75 = arith.addf %66, %74 : vector<32x128xf32>
    %cst_33 = arith.constant dense<0.000000e+00> : vector<32x128xf32>
    %76 = tpu.matmul %4, %75, %cst_33 {dimension_numbers = #tpu.dot_dimension_numbers<[1], [0], [0], [1], [0, 0, 1, 1], [], []>} : vector<32x32xf32>, vector<32x128xf32>, vector<32x128xf32> -> vector<32x128xf32>
    %77 = vector.broadcast %8 : vector<32x1xf32> to vector<32x128xf32>
    %78 = arith.addf %76, %77 : vector<32x128xf32>
    %79 = math.tanh %78 : vector<32x128xf32>
    %80 = arith.mulf %79, %67 : vector<32x128xf32>
    %81 = arith.addf %66, %80 : vector<32x128xf32>
    %cst_34 = arith.constant dense<0.000000e+00> : vector<1x128xf32>
    %82 = tpu.matmul %9, %81, %cst_34 {dimension_numbers = #tpu.dot_dimension_numbers<[1], [0], [0], [1], [0, 0, 1, 1], [], []>} : vector<1x32xf32>, vector<32x128xf32>, vector<1x128xf32> -> vector<1x128xf32>
    %83 = vector.broadcast %10 : vector<1x1xf32> to vector<1x128xf32>
    %84 = arith.addf %82, %83 : vector<1x128xf32>
    %c0_35 = arith.constant 0 : index
    %c256_36 = arith.constant 256 : index
    %85 = vector.load %arg7[%c0_35, %c256_36] : memref<1x512xf32, #tpu.memory_space<vmem>>, vector<1x128xf32>
    tpu.vector_store %arg7[%c0_35, %c256_36], %84 {strides = array<i32>} : memref<1x512xf32, #tpu.memory_space<vmem>>, vector<1x128xf32>,
    %c0_37 = arith.constant 0 : index
    %c384 = arith.constant 384 : index
    %86 = vector.load %arg1[%c0_37, %c384] : memref<3x512xf32, #tpu.memory_space<vmem>>, vector<3x128xf32>
    %cst_38 = arith.constant dense<0.000000e+00> : vector<96x128xf32>
    %87 = tpu.matmul %0, %86, %cst_38 {dimension_numbers = #tpu.dot_dimension_numbers<[1], [0], [0], [1], [0, 0, 1, 1], [], []>} : vector<96x3xf32>, vector<3x128xf32>, vector<96x128xf32> -> vector<96x128xf32>
    %88 = math.tanh %87 : vector<96x128xf32>
    %89 = vector.extract_strided_slice %88 {offsets = [0, 0], sizes = [32, 128], strides = [1, 1]} : vector<96x128xf32> to vector<32x128xf32>
    %90 = vector.extract_strided_slice %88 {offsets = [32, 0], sizes = [32, 128], strides = [1, 1]} : vector<96x128xf32> to vector<32x128xf32>
    %91 = vector.extract_strided_slice %88 {offsets = [64, 0], sizes = [32, 128], strides = [1, 1]} : vector<96x128xf32> to vector<32x128xf32>
    %92 = arith.subf %90, %91 : vector<32x128xf32>
    %93 = arith.mulf %89, %92 : vector<32x128xf32>
    %94 = arith.addf %91, %93 : vector<32x128xf32>
    %cst_39 = arith.constant dense<0.000000e+00> : vector<32x128xf32>
    %95 = tpu.matmul %2, %94, %cst_39 {dimension_numbers = #tpu.dot_dimension_numbers<[1], [0], [0], [1], [0, 0, 1, 1], [], []>} : vector<32x32xf32>, vector<32x128xf32>, vector<32x128xf32> -> vector<32x128xf32>
    %96 = vector.broadcast %6 : vector<32x1xf32> to vector<32x128xf32>
    %97 = arith.addf %95, %96 : vector<32x128xf32>
    %98 = math.tanh %97 : vector<32x128xf32>
    %99 = arith.mulf %98, %92 : vector<32x128xf32>
    %100 = arith.addf %91, %99 : vector<32x128xf32>
    %cst_40 = arith.constant dense<0.000000e+00> : vector<32x128xf32>
    %101 = tpu.matmul %4, %100, %cst_40 {dimension_numbers = #tpu.dot_dimension_numbers<[1], [0], [0], [1], [0, 0, 1, 1], [], []>} : vector<32x32xf32>, vector<32x128xf32>, vector<32x128xf32> -> vector<32x128xf32>
    %102 = vector.broadcast %8 : vector<32x1xf32> to vector<32x128xf32>
    %103 = arith.addf %101, %102 : vector<32x128xf32>
    %104 = math.tanh %103 : vector<32x128xf32>
    %105 = arith.mulf %104, %92 : vector<32x128xf32>
    %106 = arith.addf %91, %105 : vector<32x128xf32>
    %cst_41 = arith.constant dense<0.000000e+00> : vector<1x128xf32>
    %107 = tpu.matmul %9, %106, %cst_41 {dimension_numbers = #tpu.dot_dimension_numbers<[1], [0], [0], [1], [0, 0, 1, 1], [], []>} : vector<1x32xf32>, vector<32x128xf32>, vector<1x128xf32> -> vector<1x128xf32>
    %108 = vector.broadcast %10 : vector<1x1xf32> to vector<1x128xf32>
    %109 = arith.addf %107, %108 : vector<1x128xf32>
    %c0_42 = arith.constant 0 : index
    %c384_43 = arith.constant 384 : index
    %110 = vector.load %arg7[%c0_42, %c384_43] : memref<1x512xf32, #tpu.memory_space<vmem>>, vector<1x128xf32>
    tpu.vector_store %arg7[%c0_42, %c384_43], %109 {strides = array<i32>} : memref<1x512xf32, #tpu.memory_space<vmem>>, vector<1x128xf32>,
    return
  }
  func.func @transform_0(%arg0: i32) -> (i32, i32) {
    %c0_i32 = arith.constant 0 : i32
    %c0_i32_0 = arith.constant 0 : i32
    return %c0_i32, %arg0 : i32, i32
  }
  func.func @transform_1(%arg0: i32) -> (i32, i32) {
    %c0_i32 = arith.constant 0 : i32
    %c0_i32_0 = arith.constant 0 : i32
    %c0_i32_1 = arith.constant 0 : i32
    return %c0_i32, %c0_i32_0 : i32, i32
  }
  func.func @transform_2(%arg0: i32) -> (i32, i32, i32) {
    %c0_i32 = arith.constant 0 : i32
    %c0_i32_0 = arith.constant 0 : i32
    %c0_i32_1 = arith.constant 0 : i32
    %c0_i32_2 = arith.constant 0 : i32
    return %c0_i32, %c0_i32_0, %c0_i32_1 : i32, i32, i32
  }
  func.func @transform_3(%arg0: i32) -> (i32, i32, i32) {
    %c0_i32 = arith.constant 0 : i32
    %c0_i32_0 = arith.constant 0 : i32
    %c0_i32_1 = arith.constant 0 : i32
    %c0_i32_2 = arith.constant 0 : i32
    return %c0_i32, %c0_i32_0, %c0_i32_1 : i32, i32, i32
  }
  func.func @transform_4(%arg0: i32) -> (i32, i32) {
    %c0_i32 = arith.constant 0 : i32
    %c0_i32_0 = arith.constant 0 : i32
    %c0_i32_1 = arith.constant 0 : i32
    return %c0_i32, %c0_i32_0 : i32, i32
  }
  func.func @transform_5(%arg0: i32) -> (i32, i32) {
    %c0_i32 = arith.constant 0 : i32
    %c0_i32_0 = arith.constant 0 : i32
    %c0_i32_1 = arith.constant 0 : i32
    return %c0_i32, %c0_i32_0 : i32, i32
  }
  func.func @transform_6(%arg0: i32) -> (i32, i32) {
    %c0_i32 = arith.constant 0 : i32
    %c0_i32_0 = arith.constant 0 : i32
    return %c0_i32, %arg0 : i32, i32
  }
}

</mosaic_0001>

<llo_original>
// kernel: net_attention.1
$region0: #{net_attention.1}
  #allocation0 [shape = 'u32[]', space=smem, size = 0x4, offset = 0x4, fixed_abs, tag = 'smem constant byte address 0x4 - core index']
  #allocation1 [shape = 'u32[144,128]{1,0:T(1,128)}', space=vmem, size = 0x12000, scoped, tag = 'internal scratch']
  #allocation2 [shape = 'f32[1,1]{1,0:T(1,128)S(1)}', space=vmem, size = 0x200, scoped, tag = 'scoped memory for net_attention.1']
  %s0 = inlined_call_operand.vmem [shape: f32[3,1024], index: 0, kind: input, shape index: {}]
  %s1 = inlined_call_operand.vmem [shape: f32[96,3], index: 1, kind: input, shape index: {}]
  %s2 = inlined_call_operand.vmem [shape: f32[2,32,32], index: 2, kind: input, shape index: {}]
  %s3 = inlined_call_operand.vmem [shape: f32[2,32,1], index: 3, kind: input, shape index: {}]
  %s4 = inlined_call_operand.vmem [shape: f32[1,32], index: 4, kind: input, shape index: {}]
  %s5 = inlined_call_operand.<no memory space> [shape: f32[1,1], index: 5, kind: input, shape index: {}]
  %s6 = inlined_call_operand.hbm [shape: f32[1,1024], index: 6, kind: output, shape index: {}]
  %s7 = sld [smem:[#allocation0]]
  $region57: #{net_attention.1} parent=0
    _
  %s9 = ssub.s32 1, %s7
  %s10 = scalar_select 0, %s9, %s7
  %v11 = vstv %s5
  %12 = vst [vmem:[#allocation2] sm:$0x1] %v11
  $region1: #{net_attention.1} parent=0
    #allocation3 [shape = 'u8[4096]{0}', space=vmem, size = 0x1000, scoped, tag = 'output window, operand 0']
    #allocation4 [shape = 's32[2]{0}', space=sflag, size = 0x8, scoped, tag = 'scoped memory for net_attention.1']
    %13 = vsyncpa [#allocation4], 0
    %s14 = scalar_lea.sflag [#allocation4], 1
    %15 = vsyncpa %s14, 0
    loop: start=0, step=1, limit=4
    $region2: #{net_attention.1} parent=1 // loop_pre_header
      _
    $region3: #{net_attention.1} parent=1 // loop_header
      %s17 = sphi 0, %s21
      %p18 = scmp.ge.s32.totalorder %s17, 4
      %s27 = sphi 0, %s29
      %s30 = sphi 0, %s27
      %s31 = sphi 0, %s30
      %s47 = sphi 0, %s31
      %s51 = sphi 0, %s51
      %s53 = sphi 0, %s51
      %s54 = sphi 0, %s53
      %s68 = sphi 0, %s54
      %s72 = sphi 0, %s72
      %s74 = sphi 0, %s72
      %s75 = sphi 0, %s74
      %s89 = sphi 0, %s75
      %s93 = sphi 0, %s93
      %s95 = sphi 0, %s93
      %s96 = sphi 0, %s95
      %s110 = sphi 0, %s96
      %s114 = sphi 0, %s114
      %s116 = sphi 0, %s114
      %s117 = sphi 0, %s116
      %s131 = sphi 0, %s117
      %s135 = sphi 0, %s135
      %s137 = sphi 0, %s135
      %s138 = sphi 0, %s137
      %s152 = sphi 0, %s138
      %s158 = sphi 0, %s160
      %s161 = sphi 0, %s158
      %s162 = sphi 0, %s161
      %s178 = sphi 0, %s162
    $region4: #{net_attention.1} parent=1 // loop_header_branch
      %20 = sbr.rel (%p18) target = $region8
    $region5: #{net_attention.1} parent=1 // loop_body
      %s22 = ssub.s32 %s17, 1
      %s23 = ssub.s32 %s17, 2
      %s24 = sadd.s32 %s17, 1
      %s25 = ssub.s32 %s17, %s24
      %p26 = scmp.eq.s32.totalorder %s25, 0
      %s28 = sadd.s32 %s27, 1
      %s29 = scalar_select %p26, %s27, %s28
      %p32 = pneg %p26
      %p33 = scmp.eq.s32.totalorder %s17, 1
      %p34 = por %p32, %p33
      %p35 = scmp.ne.s32.totalorder %s27, %s30
      %p36 = scmp.eq.s32.totalorder %s17, 0
      %p37 = por %p35, %p36
      %p38 = scmp.ne.s32.totalorder %s27, %s30
      %p39 = scmp.eq.s32.totalorder %s22, 1
      %p40 = por %p38, %p39
      %p41 = scmp.ne.s32.totalorder %s30, %s31
      %p42 = scmp.eq.s32.totalorder %s22, 0
      %p43 = por %p41, %p42
      %p44 = scmp.ne.s32.totalorder %s30, %s31
      %p45 = scmp.eq.s32.totalorder %s23, 1
      %p46 = por %p44, %p45
      %p48 = scmp.ne.s32.totalorder %s31, %s47
      %p49 = scmp.eq.s32.totalorder %s23, 0
      %p50 = por %p48, %p49
      %s52 = sadd.s32 %s51, 1
      %p55 = scmp.eq.s32.totalorder %s17, 1
      %p56 = scmp.ne.s32.totalorder %s51, %s53
      %p57 = scmp.eq.s32.totalorder %s17, 0
      %p58 = por %p56, %p57
      %p59 = scmp.ne.s32.totalorder %s51, %s53
      %p60 = scmp.eq.s32.totalorder %s22, 1
      %p61 = por %p59, %p60
      %p62 = scmp.ne.s32.totalorder %s53, %s54
      %p63 = scmp.eq.s32.totalorder %s22, 0
      %p64 = por %p62, %p63
      %p65 = scmp.ne.s32.totalorder %s53, %s54
      %p66 = scmp.eq.s32.totalorder %s23, 1
      %p67 = por %p65, %p66
      %p69 = scmp.ne.s32.totalorder %s54, %s68
      %p70 = scmp.eq.s32.totalorder %s23, 0
      %p71 = por %p69, %p70
      %s73 = sadd.s32 %s72, 1
      %p76 = scmp.eq.s32.totalorder %s17, 1
      %p77 = scmp.ne.s32.totalorder %s72, %s74
      %p78 = scmp.eq.s32.totalorder %s17, 0
      %p79 = por %p77, %p78
      %p80 = scmp.ne.s32.totalorder %s72, %s74
      %p81 = scmp.eq.s32.totalorder %s22, 1
      %p82 = por %p80, %p81
      %p83 = scmp.ne.s32.totalorder %s74, %s75
      %p84 = scmp.eq.s32.totalorder %s22, 0
      %p85 = por %p83, %p84
      %p86 = scmp.ne.s32.totalorder %s74, %s75
      %p87 = scmp.eq.s32.totalorder %s23, 1
      %p88 = por %p86, %p87
      %p90 = scmp.ne.s32.totalorder %s75, %s89
      %p91 = scmp.eq.s32.totalorder %s23, 0
      %p92 = por %p90, %p91
      %s94 = sadd.s32 %s93, 1
      %p97 = scmp.eq.s32.totalorder %s17, 1
      %p98 = scmp.ne.s32.totalorder %s93, %s95
      %p99 = scmp.eq.s32.totalorder %s17, 0
      %p100 = por %p98, %p99
      %p101 = scmp.ne.s32.totalorder %s93, %s95
      %p102 = scmp.eq.s32.totalorder %s22, 1
      %p103 = por %p101, %p102
      %p104 = scmp.ne.s32.totalorder %s95, %s96
      %p105 = scmp.eq.s32.totalorder %s22, 0
      %p106 = por %p104, %p105
      %p107 = scmp.ne.s32.totalorder %s95, %s96
      %p108 = scmp.eq.s32.totalorder %s23, 1
      %p109 = por %p107, %p108
      %p111 = scmp.ne.s32.totalorder %s96, %s110
      %p112 = scmp.eq.s32.totalorder %s23, 0
      %p113 = por %p111, %p112
      %s115 = sadd.s32 %s114, 1
      %p118 = scmp.eq.s32.totalorder %s17, 1
      %p119 = scmp.ne.s32.totalorder %s114, %s116
      %p120 = scmp.eq.s32.totalorder %s17, 0
      %p121 = por %p119, %p120
      %p122 = scmp.ne.s32.totalorder %s114, %s116
      %p123 = scmp.eq.s32.totalorder %s22, 1
      %p124 = por %p122, %p123
      %p125 = scmp.ne.s32.totalorder %s116, %s117
      %p126 = scmp.eq.s32.totalorder %s22, 0
      %p127 = por %p125, %p126
      %p128 = scmp.ne.s32.totalorder %s116, %s117
      %p129 = scmp.eq.s32.totalorder %s23, 1
      %p130 = por %p128, %p129
      %p132 = scmp.ne.s32.totalorder %s117, %s131
      %p133 = scmp.eq.s32.totalorder %s23, 0
      %p134 = por %p132, %p133
      %s136 = sadd.s32 %s135, 1
      %p139 = scmp.eq.s32.totalorder %s17, 1
      %p140 = scmp.ne.s32.totalorder %s135, %s137
      %p141 = scmp.eq.s32.totalorder %s17, 0
      %p142 = por %p140, %p141
      %p143 = scmp.ne.s32.totalorder %s135, %s137
      %p144 = scmp.eq.s32.totalorder %s22, 1
      %p145 = por %p143, %p144
      %p146 = scmp.ne.s32.totalorder %s137, %s138
      %p147 = scmp.eq.s32.totalorder %s22, 0
      %p148 = por %p146, %p147
      %p149 = scmp.ne.s32.totalorder %s137, %s138
      %p150 = scmp.eq.s32.totalorder %s23, 1
      %p151 = por %p149, %p150
      %p153 = scmp.ne.s32.totalorder %s138, %s152
      %p154 = scmp.eq.s32.totalorder %s23, 0
      %p155 = por %p153, %p154
      %s156 = ssub.s32 %s17, %s24
      %p157 = scmp.eq.s32.totalorder %s156, 0
      %s159 = sadd.s32 %s158, 1
      %s160 = scalar_select %p157, %s158, %s159
      %p163 = pneg %p157
      %p164 = scmp.eq.s32.totalorder %s17, 1
      %p165 = por %p163, %p164
      %p166 = scmp.ne.s32.totalorder %s158, %s161
      %p167 = scmp.eq.s32.totalorder %s17, 0
      %p168 = por %p166, %p167
      %p169 = scmp.ne.s32.totalorder %s158, %s161
      %p170 = scmp.eq.s32.totalorder %s22, 1
      %p171 = por %p169, %p170
      %p172 = scmp.ne.s32.totalorder %s161, %s162
      %p173 = scmp.eq.s32.totalorder %s22, 0
      %p174 = por %p172, %p173
      %p175 = scmp.ne.s32.totalorder %s161, %s162
      %p176 = scmp.eq.s32.totalorder %s23, 1
      %p177 = por %p175, %p176
      %p179 = scmp.ne.s32.totalorder %s162, %s178
      %p180 = scmp.eq.s32.totalorder %s23, 0
      %p181 = por %p179, %p180
      %p182 = scmp.le.s32.totalorder 1, %s17
      %p183 = scmp.lt.s32.totalorder %s17, 3
      %p184 = pnand %p182, %p183
      %p185 = pneg %p184
      // Predicated region
      $region9: #{net_attention.1} parent=5 // pred_check
        _
      $region10: #{net_attention.1} parent=5 // pred_check_branch
        %187 = sbr.rel (%p184) target = $region12
      $region11: #{net_attention.1} parent=5 // pred_region
        %s188 = ssub.s32 %s17, 1
        // Predicated region
        $region13: #{net_attention.1} parent=11 // pred_check
          %p189 = pneg %p64
        $region14: #{net_attention.1} parent=11 // pred_check_branch
          %191 = sbr.rel (%p189) target = $region16
        $region15: #{net_attention.1} parent=11 // pred_region
          _
        $region16: #{net_attention.1} parent=11 // pred_fallthru
          _
        // Predicated region
        $region17: #{net_attention.1} parent=11 // pred_check
          %p192 = pneg %p85
        $region18: #{net_attention.1} parent=11 // pred_check_branch
          %194 = sbr.rel (%p192) target = $region20
        $region19: #{net_attention.1} parent=11 // pred_region
          _
        $region20: #{net_attention.1} parent=11 // pred_fallthru
          _
        // Predicated region
        $region21: #{net_attention.1} parent=11 // pred_check
          %p195 = pneg %p106
        $region22: #{net_attention.1} parent=11 // pred_check_branch
          %197 = sbr.rel (%p195) target = $region24
        $region23: #{net_attention.1} parent=11 // pred_region
          _
        $region24: #{net_attention.1} parent=11 // pred_fallthru
          _
        // Predicated region
        $region25: #{net_attention.1} parent=11 // pred_check
          %p198 = pneg %p127
        $region26: #{net_attention.1} parent=11 // pred_check_branch
          %200 = sbr.rel (%p198) target = $region28
        $region27: #{net_attention.1} parent=11 // pred_region
          _
        $region28: #{net_attention.1} parent=11 // pred_fallthru
          _
        // Predicated region
        $region29: #{net_attention.1} parent=11 // pred_check
          %p201 = pneg %p148
        $region30: #{net_attention.1} parent=11 // pred_check_branch
          %203 = sbr.rel (%p201) target = $region32
        $region31: #{net_attention.1} parent=11 // pred_region
          _
        $region32: #{net_attention.1} parent=11 // pred_fallthru
          _
      $region12: #{net_attention.1} parent=5 // pred_fallthru
        _
      %p204 = scmp.lt.s32.totalorder %s17, 2
      // Predicated region
      $region33: #{net_attention.1} parent=5 // pred_check
        %p205 = pneg %p204
      $region34: #{net_attention.1} parent=5 // pred_check_branch
        %207 = sbr.rel (%p205) target = $region36
      $region35: #{net_attention.1} parent=5 // pred_region
        // Predicated region
        $region37: #{net_attention.1} parent=35 // pred_check
          %p208 = pneg %p37
        $region38: #{net_attention.1} parent=35 // pred_check_branch
          %210 = sbr.rel (%p208) target = $region40
        $region39: #{net_attention.1} parent=35 // pred_region
          %s211 = smul.u32 4, %s17
          %p212 = scmp.lt.s32.totalorder %s211, 7
          %s213 = scalar_select %p212, %s211, 7
          %s214 = smul.addr %s213, 4
          %s215 = scalar_lea.vmem %s0, %s214
          %s216 = smul.u32 4, %s17
        $region40: #{net_attention.1} parent=35 // pred_fallthru
          _
      $region36: #{net_attention.1} parent=5 // pred_fallthru
        _
      %p217 = scmp.le.s32.totalorder 1, %s17
      %p218 = scmp.lt.s32.totalorder %s17, 3
      %p219 = pnand %p217, %p218
      %p220 = pneg %p219
      // Predicated region
      $region41: #{net_attention.1} parent=5 // pred_check
        _
      $region42: #{net_attention.1} parent=5 // pred_check_branch
        %222 = sbr.rel (%p219) target = $region44
      $region43: #{net_attention.1} parent=5 // pred_region
        %s223 = ssub.s32 %s17, 1
        %s224 = smul.u32 4, %s22
        %p225 = scmp.lt.s32.totalorder %s224, 7
        %s226 = scalar_select %p225, %s224, 7
        %s227 = smul.addr %s226, 4
        %s228 = scalar_lea.vmem %s0, %s227
        %p229 = pneg %p43
        %p230 = pneg %p40
        %p231 = pneg %p64
        %p232 = pneg %p61
        %p233 = pneg %p85
        %p234 = pneg %p82
        %p235 = pneg %p106
        %p236 = pneg %p103
        %p237 = pneg %p127
        %p238 = pneg %p124
        %p239 = pneg %p148
        %p240 = pneg %p145
        %p241 = pneg %p174
        %p242 = pneg %p171
        %s243 = sand.u32 %s161, 1
        %s244 = scalar_lea.sflag [#allocation4], %s243
        %s245 = sand.u32 %s161, 1
        %s246 = smul.addr %s245, 4
        %s247 = scalar_lea.vmem [#allocation3], %s246
        %s248 = smul.u32 4, %s22
        %p249 = scmp.lt.s32.totalorder %s248, 7
        %s250 = scalar_select %p249, %s248, 7
        %s251 = smul.addr %s250, 4
        %s252 = scalar_lea.vmem %s0, %s251
        %s253 = smul.u32 4, %s22
        %s254 = smul.u32 4, %s22
        %v255 = vld [vmem:[%s1] sm:$0xff]
        %v256 = vld [vmem:[%s1 + $0x8] sm:$0xff]
        %v257 = vld [vmem:[%s1 + $0x10] sm:$0xff]
        %v258 = vld [vmem:[%s1 + $0x18] sm:$0xff]
        %v259 = vld [vmem:[%s1 + $0x20] sm:$0xff]
        %v260 = vld [vmem:[%s1 + $0x28] sm:$0xff]
        %v261 = vld [vmem:[%s1 + $0x30] sm:$0xff]
        %v262 = vld [vmem:[%s1 + $0x38] sm:$0xff]
        %v263 = vld [vmem:[%s1 + $0x40] sm:$0xff]
        %v264 = vld [vmem:[%s1 + $0x48] sm:$0xff]
        %v265 = vld [vmem:[%s1 + $0x50] sm:$0xff]
        %v266 = vld [vmem:[%s1 + $0x58] sm:$0xff]
        %v267 = vld [vmem:[%s2] sm:$0xff]
        %v268 = vld [vmem:[%s2 + $0x8] sm:$0xff]
        %v269 = vld [vmem:[%s2 + $0x10] sm:$0xff]
        %v270 = vld [vmem:[%s2 + $0x18] sm:$0xff]
        %s271 = scalar_lea.vmem %s2, 32
        %v272 = vld [vmem:[%s271] sm:$0xff]
        %v273 = vld [vmem:[%s271 + $0x8] sm:$0xff]
        %v274 = vld [vmem:[%s271 + $0x10] sm:$0xff]
        %v275 = vld [vmem:[%s271 + $0x18] sm:$0xff]
        %v276 = vld [vmem:[%s3] sm:$0xff]
        %v277 = vld [vmem:[%s3 + $0x8] sm:$0xff]
        %v278 = vld [vmem:[%s3 + $0x10] sm:$0xff]
        %v279 = vld [vmem:[%s3 + $0x18] sm:$0xff]
        %s280 = scalar_lea.vmem %s3, 32
        %v281 = vld [vmem:[%s280] sm:$0xff]
        %v282 = vld [vmem:[%s280 + $0x8] sm:$0xff]
        %v283 = vld [vmem:[%s280 + $0x10] sm:$0xff]
        %v284 = vld [vmem:[%s280 + $0x18] sm:$0xff]
        %v285 = vld [vmem:[%s4] sm:$0x1]
        %v286 = vld [vmem:[#allocation2] sm:$0x1]
        %v287 = vld [vmem:[%s252] sm:$0x7]
        %vm288 = vcmask 23552
        %v290 = vsel %vm288, %v255, 0
        %v293 = vsel %vm288, %v256, 0
        %v296 = vsel %vm288, %v257, 0
        %v299 = vsel %vm288, %v258, 0
        %v302 = vsel %vm288, %v259, 0
        %v305 = vsel %vm288, %v260, 0
        %v308 = vsel %vm288, %v261, 0
        %v311 = vsel %vm288, %v262, 0
        %v314 = vsel %vm288, %v263, 0
        %v317 = vsel %vm288, %v264, 0
        %v320 = vsel %vm288, %v265, 0
        %v323 = vsel %vm288, %v266, 0
        %vm325 = vcmask 1042432
        %v327 = vsel %vm325, %v287, 0
        %329 = vmatprep.subr.mxu0 0.0
        %330 = vmatpush1.msra.mxu0 %v327
        %331 = vmatprep.subr.mxu0 0.0
        %332 = vmatpush1.msra.mxu0 0.0
        %333 = vmatprep.subr.mxu0 0.0
        %334 = vmatpush1.msra.mxu0 0.0
        %335 = vmatprep.subr.mxu0 0.0
        %336 = vmatpush1.msra.mxu0 0.0
        %337 = vmatprep.subr.mxu0 0.0
        %338 = vmatpush1.msra.mxu0 0.0
        %339 = vmatprep.subr.mxu0 0.0
        %340 = vmatpush1.msra.mxu0 0.0
        %341 = vmatprep.subr.mxu0 0.0
        %342 = vmatpush1.msra.mxu0 0.0
        %343 = vmatprep.subr.mxu0 0.0
        %344 = vmatpush1.msra.mxu0 0.0
        %345 = vmatprep.subr.mxu0 0.0
        %346 = vmatpush1.msra.mxu0 0.0
        %347 = vmatprep.subr.mxu0 0.0
        %348 = vmatpush1.msra.mxu0 0.0
        %349 = vmatprep.subr.mxu0 0.0
        %350 = vmatpush1.msra.mxu0 0.0
        %351 = vmatprep.subr.mxu0 0.0
        %352 = vmatpush1.msra.mxu0 0.0
        %353 = vmatprep.subr.mxu0 0.0
        %354 = vmatpush1.msra.mxu0 0.0
        %355 = vmatprep.subr.mxu0 0.0
        %356 = vmatpush1.msra.mxu0 0.0
        %357 = vmatprep.subr.mxu0 0.0
        %358 = vmatpush1.msra.mxu0 0.0
        %359 = vmatprep.subr.mxu0 0.0
        %360 = vmatpush1.msra.mxu0 0.0
        %361 = vmatprep.subr.mxu0 0.0
        %362 = vmatpush1.msra.mxu0 0.0
        %363 = vmatprep.subr.mxu0 0.0
        %364 = vmatpush1.msra.mxu0 0.0
        %365 = vmatprep.subr.mxu0 0.0
        %366 = vmatpush1.msra.mxu0 0.0
        %367 = vmatprep.subr.mxu0 0.0
        %368 = vmatpush1.msra.mxu0 0.0
        %369 = vmatprep.subr.mxu0 0.0
        %370 = vmatpush1.msra.mxu0 0.0
        %371 = vmatprep.subr.mxu0 0.0
        %372 = vmatpush1.msra.mxu0 0.0
        %373 = vmatprep.subr.mxu0 0.0
        %374 = vmatpush1.msra.mxu0 0.0
        %375 = vmatprep.subr.mxu0 0.0
        %376 = vmatpush1.msra.mxu0 0.0
        %377 = vmatprep.subr.mxu0 0.0
        %378 = vmatpush1.msra.mxu0 0.0
        %379 = vmatprep.subr.mxu0 0.0
        %380 = vmatpush1.msra.mxu0 0.0
        %381 = vmatprep.subr.mxu0 0.0
        %382 = vmatpush1.msra.mxu0 0.0
        %383 = vmatprep.subr.mxu0 0.0
        %384 = vmatpush1.msra.mxu0 0.0
        %385 = vmatprep.subr.mxu0 0.0
        %386 = vmatpush1.msra.mxu0 0.0
        %387 = vmatprep.subr.mxu0 0.0
        %388 = vmatpush1.msra.mxu0 0.0
        %389 = vmatprep.subr.mxu0 0.0
        %390 = vmatpush1.msra.mxu0 0.0
        %391 = vmatprep.subr.mxu0 0.0
        %392 = vmatpush1.msra.mxu0 0.0
        %393 = vmatprep.mubr.f32.mxu0 0.0
        %394 = vmatmul.mubr.f32.gmra.mrb[0].mxu0 %v290
        %v395 = vpop.f32.mrb[0].mxu0
        %v396 = vadd.f32 0.0, %v395
        %v397 = vpop.f32.mrb[0].mxu0
        %398 = vmatprep.mubr.f32.mxu0 0.0
        %399 = vmatmul.mubr.f32.gmra.mrb[0].mxu0 %v293
        %v400 = vpop.f32.mrb[0].mxu0
        %v401 = vadd.f32 0.0, %v400
        %v402 = vpop.f32.mrb[0].mxu0
        %403 = vmatprep.mubr.f32.mxu0 0.0
        %404 = vmatmul.mubr.f32.gmra.mrb[0].mxu0 %v296
        %v405 = vpop.f32.mrb[0].mxu0
        %v406 = vadd.f32 0.0, %v405
        %v407 = vpop.f32.mrb[0].mxu0
        %408 = vmatprep.mubr.f32.mxu0 0.0
        %409 = vmatmul.mubr.f32.gmra.mrb[0].mxu0 %v299
        %v410 = vpop.f32.mrb[0].mxu0
        %v411 = vadd.f32 0.0, %v410
        %v412 = vpop.f32.mrb[0].mxu0
        %413 = vmatprep.mubr.f32.mxu0 0.0
        %414 = vmatmul.mubr.f32.gmra.mrb[0].mxu0 %v302
        %v415 = vpop.f32.mrb[0].mxu0
        %v416 = vadd.f32 0.0, %v415
        %v417 = vpop.f32.mrb[0].mxu0
        %418 = vmatprep.mubr.f32.mxu0 0.0
        %419 = vmatmul.mubr.f32.gmra.mrb[0].mxu0 %v305
        %v420 = vpop.f32.mrb[0].mxu0
        %v421 = vadd.f32 0.0, %v420
        %v422 = vpop.f32.mrb[0].mxu0
        %423 = vmatprep.mubr.f32.mxu0 0.0
        %424 = vmatmul.mubr.f32.gmra.mrb[0].mxu0 %v308
        %v425 = vpop.f32.mrb[0].mxu0
        %v426 = vadd.f32 0.0, %v425
        %v427 = vpop.f32.mrb[0].mxu0
        %428 = vmatprep.mubr.f32.mxu0 0.0
        %429 = vmatmul.mubr.f32.gmra.mrb[0].mxu0 %v311
        %v430 = vpop.f32.mrb[0].mxu0
        %v431 = vadd.f32 0.0, %v430
        %v432 = vpop.f32.mrb[0].mxu0
        %433 = vmatprep.mubr.f32.mxu0 0.0
        %434 = vmatmul.mubr.f32.gmra.mrb[0].mxu0 %v314
        %v435 = vpop.f32.mrb[0].mxu0
        %v436 = vadd.f32 0.0, %v435
        %v437 = vpop.f32.mrb[0].mxu0
        %438 = vmatprep.mubr.f32.mxu0 0.0
        %439 = vmatmul.mubr.f32.gmra.mrb[0].mxu0 %v317
        %v440 = vpop.f32.mrb[0].mxu0
        %v441 = vadd.f32 0.0, %v440
        %v442 = vpop.f32.mrb[0].mxu0
        %443 = vmatprep.mubr.f32.mxu0 0.0
        %444 = vmatmul.mubr.f32.gmra.mrb[0].mxu0 %v320
        %v445 = vpop.f32.mrb[0].mxu0
        %v446 = vadd.f32 0.0, %v445
        %v447 = vpop.f32.mrb[0].mxu0
        %448 = vmatprep.mubr.f32.mxu0 0.0
        %449 = vmatmul.mubr.f32.gmra.mrb[0].mxu0 %v323
        %v450 = vpop.f32.mrb[0].mxu0
        %v451 = vadd.f32 0.0, %v450
        %v452 = vpop.f32.mrb[0].mxu0
        %453 = vdwg.mxu0
        %v454 = vtanh.pop %v396
        %v455 = vtanh.pop %v401
        %v456 = vtanh.pop %v406
        %v457 = vtanh.pop %v411
        %v458 = vtanh.pop %v416
        %v459 = vtanh.pop %v421
        %v460 = vtanh.pop %v426
        %v461 = vtanh.pop %v431
        %v462 = vtanh.pop %v436
        %v463 = vtanh.pop %v441
        %v464 = vtanh.pop %v446
        %v465 = vtanh.pop %v451
        %v466 = vsub.f32 %v458, %v462
        %v467 = vsub.f32 %v459, %v463
        %v468 = vsub.f32 %v460, %v464
        %v469 = vsub.f32 %v461, %v465
        %v470 = vmul.f32 %v454, %v466
        %v471 = vmul.f32 %v455, %v467
        %v472 = vmul.f32 %v456, %v468
        %v473 = vmul.f32 %v457, %v469
        %v474 = vadd.f32 %v462, %v470
        %v475 = vadd.f32 %v463, %v471
        %v476 = vadd.f32 %v464, %v472
        %v477 = vadd.f32 %v465, %v473
        %479 = vset.pattern.permute.xlu0 0
        %480 = vperm.xlu0 %479, %v276
        %v481 = vpop.permute.xlu0 %480
        %484 = vset.pattern.permute.xlu0 0
        %485 = vperm.xlu0 %484, %v277
        %v486 = vpop.permute.xlu0 %485
        %489 = vset.pattern.permute.xlu0 0
        %490 = vperm.xlu0 %489, %v278
        %v491 = vpop.permute.xlu0 %490
        %494 = vset.pattern.permute.xlu0 0
        %495 = vperm.xlu0 %494, %v279
        %v496 = vpop.permute.xlu0 %495
        %vm498 = vcmask 261120
        %v500 = vsel %vm498, %v267, 0
        %v503 = vsel %vm498, %v268, 0
        %v506 = vsel %vm498, %v269, 0
        %v509 = vsel %vm498, %v270, 0
        %511 = vmatprep.subr.mxu0 0.0
        %512 = vmatpush1.msra.mxu0 %v474
        %513 = vmatprep.subr.mxu0 0.0
        %514 = vmatpush1.msra.mxu0 %v475
        %515 = vmatprep.subr.mxu0 0.0
        %516 = vmatpush1.msra.mxu0 %v476
        %517 = vmatprep.subr.mxu0 0.0
        %518 = vmatpush1.msra.mxu0 %v477
        %519 = vmatprep.subr.mxu0 0.0
        %520 = vmatpush1.msra.mxu0 0.0
        %521 = vmatprep.subr.mxu0 0.0
        %522 = vmatpush1.msra.mxu0 0.0
        %523 = vmatprep.subr.mxu0 0.0
        %524 = vmatpush1.msra.mxu0 0.0
        %525 = vmatprep.subr.mxu0 0.0
        %526 = vmatpush1.msra.mxu0 0.0
        %527 = vmatprep.subr.mxu0 0.0
        %528 = vmatpush1.msra.mxu0 0.0
        %529 = vmatprep.subr.mxu0 0.0
        %530 = vmatpush1.msra.mxu0 0.0
        %531 = vmatprep.subr.mxu0 0.0
        %532 = vmatpush1.msra.mxu0 0.0
        %533 = vmatprep.subr.mxu0 0.0
        %534 = vmatpush1.msra.mxu0 0.0
        %535 = vmatprep.subr.mxu0 0.0
        %536 = vmatpush1.msra.mxu0 0.0
        %537 = vmatprep.subr.mxu0 0.0
        %538 = vmatpush1.msra.mxu0 0.0
        %539 = vmatprep.subr.mxu0 0.0
        %540 = vmatpush1.msra.mxu0 0.0
        %541 = vmatprep.subr.mxu0 0.0
        %542 = vmatpush1.msra.mxu0 0.0
        %543 = vmatprep.subr.mxu0 0.0
        %544 = vmatpush1.msra.mxu0 0.0
        %545 = vmatprep.subr.mxu0 0.0
        %546 = vmatpush1.msra.mxu0 0.0
        %547 = vmatprep.subr.mxu0 0.0
        %548 = vmatpush1.msra.mxu0 0.0
        %549 = vmatprep.subr.mxu0 0.0
        %550 = vmatpush1.msra.mxu0 0.0
        %551 = vmatprep.subr.mxu0 0.0
        %552 = vmatpush1.msra.mxu0 0.0
        %553 = vmatprep.subr.mxu0 0.0
        %554 = vmatpush1.msra.mxu0 0.0
        %555 = vmatprep.subr.mxu0 0.0
        %556 = vmatpush1.msra.mxu0 0.0
        %557 = vmatprep.subr.mxu0 0.0
        %558 = vmatpush1.msra.mxu0 0.0
        %559 = vmatprep.subr.mxu0 0.0
        %560 = vmatpush1.msra.mxu0 0.0
        %561 = vmatprep.subr.mxu0 0.0
        %562 = vmatpush1.msra.mxu0 0.0
        %563 = vmatprep.subr.mxu0 0.0
        %564 = vmatpush1.msra.mxu0 0.0
        %565 = vmatprep.subr.mxu0 0.0
        %566 = vmatpush1.msra.mxu0 0.0
        %567 = vmatprep.subr.mxu0 0.0
        %568 = vmatpush1.msra.mxu0 0.0
        %569 = vmatprep.subr.mxu0 0.0
        %570 = vmatpush1.msra.mxu0 0.0
        %571 = vmatprep.subr.mxu0 0.0
        %572 = vmatpush1.msra.mxu0 0.0
        %573 = vmatprep.subr.mxu0 0.0
        %574 = vmatpush1.msra.mxu0 0.0
        %575 = vmatprep.mubr.f32.mxu0 0.0
        %576 = vmatmul.mubr.f32.gmra.mrb[0].mxu0 %v500
        %v577 = vpop.f32.mrb[0].mxu0
        %v578 = vadd.f32 %v481, %v577
        %v579 = vpop.f32.mrb[0].mxu0
        %580 = vmatprep.mubr.f32.mxu0 0.0
        %581 = vmatmul.mubr.f32.gmra.mrb[0].mxu0 %v503
        %v582 = vpop.f32.mrb[0].mxu0
        %v583 = vadd.f32 %v486, %v582
        %v584 = vpop.f32.mrb[0].mxu0
        %585 = vmatprep.mubr.f32.mxu0 0.0
        %586 = vmatmul.mubr.f32.gmra.mrb[0].mxu0 %v506
        %v587 = vpop.f32.mrb[0].mxu0
        %v588 = vadd.f32 %v491, %v587
        %v589 = vpop.f32.mrb[0].mxu0
        %590 = vmatprep.mubr.f32.mxu0 0.0
        %591 = vmatmul.mubr.f32.gmra.mrb[0].mxu0 %v509
        %v592 = vpop.f32.mrb[0].mxu0
        %v593 = vadd.f32 %v496, %v592
        %v594 = vpop.f32.mrb[0].mxu0
        %595 = vdwg.mxu0
        %v596 = vtanh.pop %v578
        %v597 = vtanh.pop %v583
        %v598 = vtanh.pop %v588
        %v599 = vtanh.pop %v593
        %v600 = vmul.f32 %v596, %v466
        %v601 = vmul.f32 %v597, %v467
        %v602 = vmul.f32 %v598, %v468
        %v603 = vmul.f32 %v599, %v469
        %v604 = vadd.f32 %v462, %v600
        %v605 = vadd.f32 %v463, %v601
        %v606 = vadd.f32 %v464, %v602
        %v607 = vadd.f32 %v465, %v603
        %609 = vset.pattern.permute.xlu0 0
        %610 = vperm.xlu0 %609, %v281
        %v611 = vpop.permute.xlu0 %610
        %614 = vset.pattern.permute.xlu0 0
        %615 = vperm.xlu0 %614, %v282
        %v616 = vpop.permute.xlu0 %615
        %619 = vset.pattern.permute.xlu0 0
        %620 = vperm.xlu0 %619, %v283
        %v621 = vpop.permute.xlu0 %620
        %624 = vset.pattern.permute.xlu0 0
        %625 = vperm.xlu0 %624, %v284
        %v626 = vpop.permute.xlu0 %625
        %v629 = vsel %vm498, %v272, 0
        %v632 = vsel %vm498, %v273, 0
        %v635 = vsel %vm498, %v274, 0
        %v638 = vsel %vm498, %v275, 0
        %640 = vmatprep.subr.mxu0 0.0
        %641 = vmatpush1.msra.mxu0 %v604
        %642 = vmatprep.subr.mxu0 0.0
        %643 = vmatpush1.msra.mxu0 %v605
        %644 = vmatprep.subr.mxu0 0.0
        %645 = vmatpush1.msra.mxu0 %v606
        %646 = vmatprep.subr.mxu0 0.0
        %647 = vmatpush1.msra.mxu0 %v607
        %648 = vmatprep.subr.mxu0 0.0
        %649 = vmatpush1.msra.mxu0 0.0
        %650 = vmatprep.subr.mxu0 0.0
        %651 = vmatpush1.msra.mxu0 0.0
        %652 = vmatprep.subr.mxu0 0.0
        %653 = vmatpush1.msra.mxu0 0.0
        %654 = vmatprep.subr.mxu0 0.0
        %655 = vmatpush1.msra.mxu0 0.0
        %656 = vmatprep.subr.mxu0 0.0
        %657 = vmatpush1.msra.mxu0 0.0
        %658 = vmatprep.subr.mxu0 0.0
        %659 = vmatpush1.msra.mxu0 0.0
        %660 = vmatprep.subr.mxu0 0.0
        %661 = vmatpush1.msra.mxu0 0.0
        %662 = vmatprep.subr.mxu0 0.0
        %663 = vmatpush1.msra.mxu0 0.0
        %664 = vmatprep.subr.mxu0 0.0
        %665 = vmatpush1.msra.mxu0 0.0
        %666 = vmatprep.subr.mxu0 0.0
        %667 = vmatpush1.msra.mxu0 0.0
        %668 = vmatprep.subr.mxu0 0.0
        %669 = vmatpush1.msra.mxu0 0.0
        %670 = vmatprep.subr.mxu0 0.0
        %671 = vmatpush1.msra.mxu0 0.0
        %672 = vmatprep.subr.mxu0 0.0
        %673 = vmatpush1.msra.mxu0 0.0
        %674 = vmatprep.subr.mxu0 0.0
        %675 = vmatpush1.msra.mxu0 0.0
        %676 = vmatprep.subr.mxu0 0.0
        %677 = vmatpush1.msra.mxu0 0.0
        %678 = vmatprep.subr.mxu0 0.0
        %679 = vmatpush1.msra.mxu0 0.0
        %680 = vmatprep.subr.mxu0 0.0
        %681 = vmatpush1.msra.mxu0 0.0
        %682 = vmatprep.subr.mxu0 0.0
        %683 = vmatpush1.msra.mxu0 0.0
        %684 = vmatprep.subr.mxu0 0.0
        %685 = vmatpush1.msra.mxu0 0.0
        %686 = vmatprep.subr.mxu0 0.0
        %687 = vmatpush1.msra.mxu0 0.0
        %688 = vmatprep.subr.mxu0 0.0
        %689 = vmatpush1.msra.mxu0 0.0
        %690 = vmatprep.subr.mxu0 0.0
        %691 = vmatpush1.msra.mxu0 0.0
        %692 = vmatprep.subr.mxu0 0.0
        %693 = vmatpush1.msra.mxu0 0.0
        %694 = vmatprep.subr.mxu0 0.0
        %695 = vmatpush1.msra.mxu0 0.0
        %696 = vmatprep.subr.mxu0 0.0
        %697 = vmatpush1.msra.mxu0 0.0
        %698 = vmatprep.subr.mxu0 0.0
        %699 = vmatpush1.msra.mxu0 0.0
        %700 = vmatprep.subr.mxu0 0.0
        %701 = vmatpush1.msra.mxu0 0.0
        %702 = vmatprep.subr.mxu0 0.0
        %703 = vmatpush1.msra.mxu0 0.0
        %704 = vmatprep.mubr.f32.mxu0 0.0
        %705 = vmatmul.mubr.f32.gmra.mrb[0].mxu0 %v629
        %v706 = vpop.f32.mrb[0].mxu0
        %v707 = vadd.f32 %v611, %v706
        %v708 = vpop.f32.mrb[0].mxu0
        %709 = vmatprep.mubr.f32.mxu0 0.0
        %710 = vmatmul.mubr.f32.gmra.mrb[0].mxu0 %v632
        %v711 = vpop.f32.mrb[0].mxu0
        %v712 = vadd.f32 %v616, %v711
        %v713 = vpop.f32.mrb[0].mxu0
        %714 = vmatprep.mubr.f32.mxu0 0.0
        %715 = vmatmul.mubr.f32.gmra.mrb[0].mxu0 %v635
        %v716 = vpop.f32.mrb[0].mxu0
        %v717 = vadd.f32 %v621, %v716
        %v718 = vpop.f32.mrb[0].mxu0
        %719 = vmatprep.mubr.f32.mxu0 0.0
        %720 = vmatmul.mubr.f32.gmra.mrb[0].mxu0 %v638
        %v721 = vpop.f32.mrb[0].mxu0
        %v722 = vadd.f32 %v626, %v721
        %v723 = vpop.f32.mrb[0].mxu0
        %724 = vdwg.mxu0
        %v725 = vtanh.pop %v707
        %v726 = vtanh.pop %v712
        %v727 = vtanh.pop %v717
        %v728 = vtanh.pop %v722
        %v729 = vmul.f32 %v725, %v466
        %v730 = vmul.f32 %v726, %v467
        %v731 = vmul.f32 %v727, %v468
        %v732 = vmul.f32 %v728, %v469
        %v733 = vadd.f32 %v462, %v729
        %v734 = vadd.f32 %v463, %v730
        %v735 = vadd.f32 %v464, %v731
        %v736 = vadd.f32 %v465, %v732
        %738 = vset.pattern.permute.xlu0 0
        %739 = vperm.xlu0 %738, %v286
        %v740 = vpop.permute.xlu0 %739
        %v742 = vlaneseq
        %v743 = vshrl.u32 %v742, 7
        %v744 = vsub.s32 0, %v743
        %v745 = vrot.slane %v740, %v744
        %v747 = vsel %vm498, %v285, 0
        %749 = vmatprep.subr.mxu0 0.0
        %750 = vmatpush1.msra.mxu0 %v733
        %751 = vmatprep.subr.mxu0 0.0
        %752 = vmatpush1.msra.mxu0 %v734
        %753 = vmatprep.subr.mxu0 0.0
        %754 = vmatpush1.msra.mxu0 %v735
        %755 = vmatprep.subr.mxu0 0.0
        %756 = vmatpush1.msra.mxu0 %v736
        %757 = vmatprep.subr.mxu0 0.0
        %758 = vmatpush1.msra.mxu0 0.0
        %759 = vmatprep.subr.mxu0 0.0
        %760 = vmatpush1.msra.mxu0 0.0
        %761 = vmatprep.subr.mxu0 0.0
        %762 = vmatpush1.msra.mxu0 0.0
        %763 = vmatprep.subr.mxu0 0.0
        %764 = vmatpush1.msra.mxu0 0.0
        %765 = vmatprep.subr.mxu0 0.0
        %766 = vmatpush1.msra.mxu0 0.0
        %767 = vmatprep.subr.mxu0 0.0
        %768 = vmatpush1.msra.mxu0 0.0
        %769 = vmatprep.subr.mxu0 0.0
        %770 = vmatpush1.msra.mxu0 0.0
        %771 = vmatprep.subr.mxu0 0.0
        %772 = vmatpush1.msra.mxu0 0.0
        %773 = vmatprep.subr.mxu0 0.0
        %774 = vmatpush1.msra.mxu0 0.0
        %775 = vmatprep.subr.mxu0 0.0
        %776 = vmatpush1.msra.mxu0 0.0
        %777 = vmatprep.subr.mxu0 0.0
        %778 = vmatpush1.msra.mxu0 0.0
        %779 = vmatprep.subr.mxu0 0.0
        %780 = vmatpush1.msra.mxu0 0.0
        %781 = vmatprep.subr.mxu0 0.0
        %782 = vmatpush1.msra.mxu0 0.0
        %783 = vmatprep.subr.mxu0 0.0
        %784 = vmatpush1.msra.mxu0 0.0
        %785 = vmatprep.subr.mxu0 0.0
        %786 = vmatpush1.msra.mxu0 0.0
        %787 = vmatprep.subr.mxu0 0.0
        %788 = vmatpush1.msra.mxu0 0.0
        %789 = vmatprep.subr.mxu0 0.0
        %790 = vmatpush1.msra.mxu0 0.0
        %791 = vmatprep.subr.mxu0 0.0
        %792 = vmatpush1.msra.mxu0 0.0
        %793 = vmatprep.subr.mxu0 0.0
        %794 = vmatpush1.msra.mxu0 0.0
        %795 = vmatprep.subr.mxu0 0.0
        %796 = vmatpush1.msra.mxu0 0.0
        %797 = vmatprep.subr.mxu0 0.0
        %798 = vmatpush1.msra.mxu0 0.0
        %799 = vmatprep.subr.mxu0 0.0
        %800 = vmatpush1.msra.mxu0 0.0
        %801 = vmatprep.subr.mxu0 0.0
        %802 = vmatpush1.msra.mxu0 0.0
        %803 = vmatprep.subr.mxu0 0.0
        %804 = vmatpush1.msra.mxu0 0.0
        %805 = vmatprep.subr.mxu0 0.0
        %806 = vmatpush1.msra.mxu0 0.0
        %807 = vmatprep.subr.mxu0 0.0
        %808 = vmatpush1.msra.mxu0 0.0
        %809 = vmatprep.subr.mxu0 0.0
        %810 = vmatpush1.msra.mxu0 0.0
        %811 = vmatprep.subr.mxu0 0.0
        %812 = vmatpush1.msra.mxu0 0.0
        %813 = vmatprep.mubr.f32.mxu0 0.0
        %814 = vmatmul.mubr.f32.gmra.mrb[0].mxu0 %v747
        %v815 = vpop.f32.mrb[0].mxu0
        %v816 = vadd.f32 %v745, %v815
        %v817 = vpop.f32.mrb[0].mxu0
        %818 = vdwg.mxu0
        %v819 = vlaneseq
        %vm820 = vcmp.ge.s32.totalorder %v819, 0
        %vm821 = vcmp.lt.s32.totalorder %v819, 128
        %vm822 = vmand %vm820, %vm821
        %823 = vst.msk [vmem:[%s247] sm:$0x1] %vm822, %v816
        %v824 = vld [vmem:[%s252 + $0x4] sm:$0x7]
        %v826 = vsel %vm325, %v824, 0
        %828 = vmatprep.subr.mxu0 0.0
        %829 = vmatpush1.msra.mxu0 %v826
        %830 = vmatprep.subr.mxu0 0.0
        %831 = vmatpush1.msra.mxu0 0.0
        %832 = vmatprep.subr.mxu0 0.0
        %833 = vmatpush1.msra.mxu0 0.0
        %834 = vmatprep.subr.mxu0 0.0
        %835 = vmatpush1.msra.mxu0 0.0
        %836 = vmatprep.subr.mxu0 0.0
        %837 = vmatpush1.msra.mxu0 0.0
        %838 = vmatprep.subr.mxu0 0.0
        %839 = vmatpush1.msra.mxu0 0.0
        %840 = vmatprep.subr.mxu0 0.0
        %841 = vmatpush1.msra.mxu0 0.0
        %842 = vmatprep.subr.mxu0 0.0
        %843 = vmatpush1.msra.mxu0 0.0
        %844 = vmatprep.subr.mxu0 0.0
        %845 = vmatpush1.msra.mxu0 0.0
        %846 = vmatprep.subr.mxu0 0.0
        %847 = vmatpush1.msra.mxu0 0.0
        %848 = vmatprep.subr.mxu0 0.0
        %849 = vmatpush1.msra.mxu0 0.0
        %850 = vmatprep.subr.mxu0 0.0
        %851 = vmatpush1.msra.mxu0 0.0
        %852 = vmatprep.subr.mxu0 0.0
        %853 = vmatpush1.msra.mxu0 0.0
        %854 = vmatprep.subr.mxu0 0.0
        %855 = vmatpush1.msra.mxu0 0.0
        %856 = vmatprep.subr.mxu0 0.0
        %857 = vmatpush1.msra.mxu0 0.0
        %858 = vmatprep.subr.mxu0 0.0
        %859 = vmatpush1.msra.mxu0 0.0
        %860 = vmatprep.subr.mxu0 0.0
        %861 = vmatpush1.msra.mxu0 0.0
        %862 = vmatprep.subr.mxu0 0.0
        %863 = vmatpush1.msra.mxu0 0.0
        %864 = vmatprep.subr.mxu0 0.0
        %865 = vmatpush1.msra.mxu0 0.0
        %866 = vmatprep.subr.mxu0 0.0
        %867 = vmatpush1.msra.mxu0 0.0
        %868 = vmatprep.subr.mxu0 0.0
        %869 = vmatpush1.msra.mxu0 0.0
        %870 = vmatprep.subr.mxu0 0.0
        %871 = vmatpush1.msra.mxu0 0.0
        %872 = vmatprep.subr.mxu0 0.0
        %873 = vmatpush1.msra.mxu0 0.0
        %874 = vmatprep.subr.mxu0 0.0
        %875 = vmatpush1.msra.mxu0 0.0
        %876 = vmatprep.subr.mxu0 0.0
        %877 = vmatpush1.msra.mxu0 0.0
        %878 = vmatprep.subr.mxu0 0.0
        %879 = vmatpush1.msra.mxu0 0.0
        %880 = vmatprep.subr.mxu0 0.0
        %881 = vmatpush1.msra.mxu0 0.0
        %882 = vmatprep.subr.mxu0 0.0
        %883 = vmatpush1.msra.mxu0 0.0
        %884 = vmatprep.subr.mxu0 0.0
        %885 = vmatpush1.msra.mxu0 0.0
        %886 = vmatprep.subr.mxu0 0.0
        %887 = vmatpush1.msra.mxu0 0.0
        %888 = vmatprep.subr.mxu0 0.0
        %889 = vmatpush1.msra.mxu0 0.0
        %890 = vmatprep.subr.mxu0 0.0
        %891 = vmatpush1.msra.mxu0 0.0
        %892 = vmatprep.mubr.f32.mxu0 0.0
        %893 = vmatmul.mubr.f32.gmra.mrb[0].mxu0 %v290
        %v894 = vpop.f32.mrb[0].mxu0
        %v895 = vadd.f32 0.0, %v894
        %v896 = vpop.f32.mrb[0].mxu0
        %897 = vmatprep.mubr.f32.mxu0 0.0
        %898 = vmatmul.mubr.f32.gmra.mrb[0].mxu0 %v293
        %v899 = vpop.f32.mrb[0].mxu0
        %v900 = vadd.f32 0.0, %v899
        %v901 = vpop.f32.mrb[0].mxu0
        %902 = vmatprep.mubr.f32.mxu0 0.0
        %903 = vmatmul.mubr.f32.gmra.mrb[0].mxu0 %v296
        %v904 = vpop.f32.mrb[0].mxu0
        %v905 = vadd.f32 0.0, %v904
        %v906 = vpop.f32.mrb[0].mxu0
        %907 = vmatprep.mubr.f32.mxu0 0.0
        %908 = vmatmul.mubr.f32.gmra.mrb[0].mxu0 %v299
        %v909 = vpop.f32.mrb[0].mxu0
        %v910 = vadd.f32 0.0, %v909
        %v911 = vpop.f32.mrb[0].mxu0
        %912 = vmatprep.mubr.f32.mxu0 0.0
        %913 = vmatmul.mubr.f32.gmra.mrb[0].mxu0 %v302
        %v914 = vpop.f32.mrb[0].mxu0
        %v915 = vadd.f32 0.0, %v914
        %v916 = vpop.f32.mrb[0].mxu0
        %917 = vmatprep.mubr.f32.mxu0 0.0
        %918 = vmatmul.mubr.f32.gmra.mrb[0].mxu0 %v305
        %v919 = vpop.f32.mrb[0].mxu0
        %v920 = vadd.f32 0.0, %v919
        %v921 = vpop.f32.mrb[0].mxu0
        %922 = vmatprep.mubr.f32.mxu0 0.0
        %923 = vmatmul.mubr.f32.gmra.mrb[0].mxu0 %v308
        %v924 = vpop.f32.mrb[0].mxu0
        %v925 = vadd.f32 0.0, %v924
        %v926 = vpop.f32.mrb[0].mxu0
        %927 = vmatprep.mubr.f32.mxu0 0.0
        %928 = vmatmul.mubr.f32.gmra.mrb[0].mxu0 %v311
        %v929 = vpop.f32.mrb[0].mxu0
        %v930 = vadd.f32 0.0, %v929
        %v931 = vpop.f32.mrb[0].mxu0
        %932 = vmatprep.mubr.f32.mxu0 0.0
        %933 = vmatmul.mubr.f32.gmra.mrb[0].mxu0 %v314
        %v934 = vpop.f32.mrb[0].mxu0
        %v935 = vadd.f32 0.0, %v934
        %v936 = vpop.f32.mrb[0].mxu0
        %937 = vmatprep.mubr.f32.mxu0 0.0
        %938 = vmatmul.mubr.f32.gmra.mrb[0].mxu0 %v317
        %v939 = vpop.f32.mrb[0].mxu0
        %v940 = vadd.f32 0.0, %v939
        %v941 = vpop.f32.mrb[0].mxu0
        %942 = vmatprep.mubr.f32.mxu0 0.0
        %943 = vmatmul.mubr.f32.gmra.mrb[0].mxu0 %v320
        %v944 = vpop.f32.mrb[0].mxu0
        %v945 = vadd.f32 0.0, %v944
        %v946 = vpop.f32.mrb[0].mxu0
        %947 = vmatprep.mubr.f32.mxu0 0.0
        %948 = vmatmul.mubr.f32.gmra.mrb[0].mxu0 %v323
        %v949 = vpop.f32.mrb[0].mxu0
        %v950 = vadd.f32 0.0, %v949
        %v951 = vpop.f32.mrb[0].mxu0
        %952 = vdwg.mxu0
        %v953 = vtanh.pop %v895
        %v954 = vtanh.pop %v900
        %v955 = vtanh.pop %v905
        %v956 = vtanh.pop %v910
        %v957 = vtanh.pop %v915
        %v958 = vtanh.pop %v920
        %v959 = vtanh.pop %v925
        %v960 = vtanh.pop %v930
        %v961 = vtanh.pop %v935
        %v962 = vtanh.pop %v940
        %v963 = vtanh.pop %v945
        %v964 = vtanh.pop %v950
        %v965 = vsub.f32 %v957, %v961
        %v966 = vsub.f32 %v958, %v962
        %v967 = vsub.f32 %v959, %v963
        %v968 = vsub.f32 %v960, %v964
        %v969 = vmul.f32 %v953, %v965
        %v970 = vmul.f32 %v954, %v966
        %v971 = vmul.f32 %v955, %v967
        %v972 = vmul.f32 %v956, %v968
        %v973 = vadd.f32 %v961, %v969
        %v974 = vadd.f32 %v962, %v970
        %v975 = vadd.f32 %v963, %v971
        %v976 = vadd.f32 %v964, %v972
        %977 = vmatprep.subr.mxu0 0.0
        %978 = vmatpush1.msra.mxu0 %v973
        %979 = vmatprep.subr.mxu0 0.0
        %980 = vmatpush1.msra.mxu0 %v974
        %981 = vmatprep.subr.mxu0 0.0
        %982 = vmatpush1.msra.mxu0 %v975
        %983 = vmatprep.subr.mxu0 0.0
        %984 = vmatpush1.msra.mxu0 %v976
        %985 = vmatprep.subr.mxu0 0.0
        %986 = vmatpush1.msra.mxu0 0.0
        %987 = vmatprep.subr.mxu0 0.0
        %988 = vmatpush1.msra.mxu0 0.0
        %989 = vmatprep.subr.mxu0 0.0
        %990 = vmatpush1.msra.mxu0 0.0
        %991 = vmatprep.subr.mxu0 0.0
        %992 = vmatpush1.msra.mxu0 0.0
        %993 = vmatprep.subr.mxu0 0.0
        %994 = vmatpush1.msra.mxu0 0.0
        %995 = vmatprep.subr.mxu0 0.0
        %996 = vmatpush1.msra.mxu0 0.0
        %997 = vmatprep.subr.mxu0 0.0
        %998 = vmatpush1.msra.mxu0 0.0
        %999 = vmatprep.subr.mxu0 0.0
        %1000 = vmatpush1.msra.mxu0 0.0
        %1001 = vmatprep.subr.mxu0 0.0
        %1002 = vmatpush1.msra.mxu0 0.0
        %1003 = vmatprep.subr.mxu0 0.0
        %1004 = vmatpush1.msra.mxu0 0.0
        %1005 = vmatprep.subr.mxu0 0.0
        %1006 = vmatpush1.msra.mxu0 0.0
        %1007 = vmatprep.subr.mxu0 0.0
        %1008 = vmatpush1.msra.mxu0 0.0
        %1009 = vmatprep.subr.mxu0 0.0
        %1010 = vmatpush1.msra.mxu0 0.0
        %1011 = vmatprep.subr.mxu0 0.0
        %1012 = vmatpush1.msra.mxu0 0.0
        %1013 = vmatprep.subr.mxu0 0.0
        %1014 = vmatpush1.msra.mxu0 0.0
        %1015 = vmatprep.subr.mxu0 0.0
        %1016 = vmatpush1.msra.mxu0 0.0
        %1017 = vmatprep.subr.mxu0 0.0
        %1018 = vmatpush1.msra.mxu0 0.0
        %1019 = vmatprep.subr.mxu0 0.0
        %1020 = vmatpush1.msra.mxu0 0.0
        %1021 = vmatprep.subr.mxu0 0.0
        %1022 = vmatpush1.msra.mxu0 0.0
        %1023 = vmatprep.subr.mxu0 0.0
        %1024 = vmatpush1.msra.mxu0 0.0
        %1025 = vmatprep.subr.mxu0 0.0
        %1026 = vmatpush1.msra.mxu0 0.0
        %1027 = vmatprep.subr.mxu0 0.0
        %1028 = vmatpush1.msra.mxu0 0.0
        %1029 = vmatprep.subr.mxu0 0.0
        %1030 = vmatpush1.msra.mxu0 0.0
        %1031 = vmatprep.subr.mxu0 0.0
        %1032 = vmatpush1.msra.mxu0 0.0
        %1033 = vmatprep.subr.mxu0 0.0
        %1034 = vmatpush1.msra.mxu0 0.0
        %1035 = vmatprep.subr.mxu0 0.0
        %1036 = vmatpush1.msra.mxu0 0.0
        %1037 = vmatprep.subr.mxu0 0.0
        %1038 = vmatpush1.msra.mxu0 0.0
        %1039 = vmatprep.subr.mxu0 0.0
        %1040 = vmatpush1.msra.mxu0 0.0
        %1041 = vmatprep.mubr.f32.mxu0 0.0
        %1042 = vmatmul.mubr.f32.gmra.mrb[0].mxu0 %v500
        %v1043 = vpop.f32.mrb[0].mxu0
        %v1044 = vadd.f32 %v481, %v1043
        %v1045 = vpop.f32.mrb[0].mxu0
        %1046 = vmatprep.mubr.f32.mxu0 0.0
        %1047 = vmatmul.mubr.f32.gmra.mrb[0].mxu0 %v503
        %v1048 = vpop.f32.mrb[0].mxu0
        %v1049 = vadd.f32 %v486, %v1048
        %v1050 = vpop.f32.mrb[0].mxu0
        %1051 = vmatprep.mubr.f32.mxu0 0.0
        %1052 = vmatmul.mubr.f32.gmra.mrb[0].mxu0 %v506
        %v1053 = vpop.f32.mrb[0].mxu0
        %v1054 = vadd.f32 %v491, %v1053
        %v1055 = vpop.f32.mrb[0].mxu0
        %1056 = vmatprep.mubr.f32.mxu0 0.0
        %1057 = vmatmul.mubr.f32.gmra.mrb[0].mxu0 %v509
        %v1058 = vpop.f32.mrb[0].mxu0
        %v1059 = vadd.f32 %v496, %v1058
        %v1060 = vpop.f32.mrb[0].mxu0
        %1061 = vdwg.mxu0
        %v1062 = vtanh.pop %v1044
        %v1063 = vtanh.pop %v1049
        %v1064 = vtanh.pop %v1054
        %v1065 = vtanh.pop %v1059
        %v1066 = vmul.f32 %v1062, %v965
        %v1067 = vmul.f32 %v1063, %v966
        %v1068 = vmul.f32 %v1064, %v967
        %v1069 = vmul.f32 %v1065, %v968
        %v1070 = vadd.f32 %v961, %v1066
        %v1071 = vadd.f32 %v962, %v1067
        %v1072 = vadd.f32 %v963, %v1068
        %v1073 = vadd.f32 %v964, %v1069
        %1074 = vmatprep.subr.mxu0 0.0
        %1075 = vmatpush1.msra.mxu0 %v1070
        %1076 = vmatprep.subr.mxu0 0.0
        %1077 = vmatpush1.msra.mxu0 %v1071
        %1078 = vmatprep.subr.mxu0 0.0
        %1079 = vmatpush1.msra.mxu0 %v1072
        %1080 = vmatprep.subr.mxu0 0.0
        %1081 = vmatpush1.msra.mxu0 %v1073
        %1082 = vmatprep.subr.mxu0 0.0
        %1083 = vmatpush1.msra.mxu0 0.0
        %1084 = vmatprep.subr.mxu0 0.0
        %1085 = vmatpush1.msra.mxu0 0.0
        %1086 = vmatprep.subr.mxu0 0.0
        %1087 = vmatpush1.msra.mxu0 0.0
        %1088 = vmatprep.subr.mxu0 0.0
        %1089 = vmatpush1.msra.mxu0 0.0
        %1090 = vmatprep.subr.mxu0 0.0
        %1091 = vmatpush1.msra.mxu0 0.0
        %1092 = vmatprep.subr.mxu0 0.0
        %1093 = vmatpush1.msra.mxu0 0.0
        %1094 = vmatprep.subr.mxu0 0.0
        %1095 = vmatpush1.msra.mxu0 0.0
        %1096 = vmatprep.subr.mxu0 0.0
        %1097 = vmatpush1.msra.mxu0 0.0
        %1098 = vmatprep.subr.mxu0 0.0
        %1099 = vmatpush1.msra.mxu0 0.0
        %1100 = vmatprep.subr.mxu0 0.0
        %1101 = vmatpush1.msra.mxu0 0.0
        %1102 = vmatprep.subr.mxu0 0.0
        %1103 = vmatpush1.msra.mxu0 0.0
        %1104 = vmatprep.subr.mxu0 0.0
        %1105 = vmatpush1.msra.mxu0 0.0
        %1106 = vmatprep.subr.mxu0 0.0
        %1107 = vmatpush1.msra.mxu0 0.0
        %1108 = vmatprep.subr.mxu0 0.0
        %1109 = vmatpush1.msra.mxu0 0.0
        %1110 = vmatprep.subr.mxu0 0.0
        %1111 = vmatpush1.msra.mxu0 0.0
        %1112 = vmatprep.subr.mxu0 0.0
        %1113 = vmatpush1.msra.mxu0 0.0
        %1114 = vmatprep.subr.mxu0 0.0
        %1115 = vmatpush1.msra.mxu0 0.0
        %1116 = vmatprep.subr.mxu0 0.0
        %1117 = vmatpush1.msra.mxu0 0.0
        %1118 = vmatprep.subr.mxu0 0.0
        %1119 = vmatpush1.msra.mxu0 0.0
        %1120 = vmatprep.subr.mxu0 0.0
        %1121 = vmatpush1.msra.mxu0 0.0
        %1122 = vmatprep.subr.mxu0 0.0
        %1123 = vmatpush1.msra.mxu0 0.0
        %1124 = vmatprep.subr.mxu0 0.0
        %1125 = vmatpush1.msra.mxu0 0.0
        %1126 = vmatprep.subr.mxu0 0.0
        %1127 = vmatpush1.msra.mxu0 0.0
        %1128 = vmatprep.subr.mxu0 0.0
        %1129 = vmatpush1.msra.mxu0 0.0
        %1130 = vmatprep.subr.mxu0 0.0
        %1131 = vmatpush1.msra.mxu0 0.0
        %1132 = vmatprep.subr.mxu0 0.0
        %1133 = vmatpush1.msra.mxu0 0.0
        %1134 = vmatprep.subr.mxu0 0.0
        %1135 = vmatpush1.msra.mxu0 0.0
        %1136 = vmatprep.subr.mxu0 0.0
        %1137 = vmatpush1.msra.mxu0 0.0
        %1138 = vmatprep.mubr.f32.mxu0 0.0
        %1139 = vmatmul.mubr.f32.gmra.mrb[0].mxu0 %v629
        %v1140 = vpop.f32.mrb[0].mxu0
        %v1141 = vadd.f32 %v611, %v1140
        %v1142 = vpop.f32.mrb[0].mxu0
        %1143 = vmatprep.mubr.f32.mxu0 0.0
        %1144 = vmatmul.mubr.f32.gmra.mrb[0].mxu0 %v632
        %v1145 = vpop.f32.mrb[0].mxu0
        %v1146 = vadd.f32 %v616, %v1145
        %v1147 = vpop.f32.mrb[0].mxu0
        %1148 = vmatprep.mubr.f32.mxu0 0.0
        %1149 = vmatmul.mubr.f32.gmra.mrb[0].mxu0 %v635
        %v1150 = vpop.f32.mrb[0].mxu0
        %v1151 = vadd.f32 %v621, %v1150
        %v1152 = vpop.f32.mrb[0].mxu0
        %1153 = vmatprep.mubr.f32.mxu0 0.0
        %1154 = vmatmul.mubr.f32.gmra.mrb[0].mxu0 %v638
        %v1155 = vpop.f32.mrb[0].mxu0
        %v1156 = vadd.f32 %v626, %v1155
        %v1157 = vpop.f32.mrb[0].mxu0
        %1158 = vdwg.mxu0
        %v1159 = vtanh.pop %v1141
        %v1160 = vtanh.pop %v1146
        %v1161 = vtanh.pop %v1151
        %v1162 = vtanh.pop %v1156
        %v1163 = vmul.f32 %v1159, %v965
        %v1164 = vmul.f32 %v1160, %v966
        %v1165 = vmul.f32 %v1161, %v967
        %v1166 = vmul.f32 %v1162, %v968
        %v1167 = vadd.f32 %v961, %v1163
        %v1168 = vadd.f32 %v962, %v1164
        %v1169 = vadd.f32 %v963, %v1165
        %v1170 = vadd.f32 %v964, %v1166
        %1171 = vmatprep.subr.mxu0 0.0
        %1172 = vmatpush1.msra.mxu0 %v1167
        %1173 = vmatprep.subr.mxu0 0.0
        %1174 = vmatpush1.msra.mxu0 %v1168
        %1175 = vmatprep.subr.mxu0 0.0
        %1176 = vmatpush1.msra.mxu0 %v1169
        %1177 = vmatprep.subr.mxu0 0.0
        %1178 = vmatpush1.msra.mxu0 %v1170
        %1179 = vmatprep.subr.mxu0 0.0
        %1180 = vmatpush1.msra.mxu0 0.0
        %1181 = vmatprep.subr.mxu0 0.0
        %1182 = vmatpush1.msra.mxu0 0.0
        %1183 = vmatprep.subr.mxu0 0.0
        %1184 = vmatpush1.msra.mxu0 0.0
        %1185 = vmatprep.subr.mxu0 0.0
        %1186 = vmatpush1.msra.mxu0 0.0
        %1187 = vmatprep.subr.mxu0 0.0
        %1188 = vmatpush1.msra.mxu0 0.0
        %1189 = vmatprep.subr.mxu0 0.0
        %1190 = vmatpush1.msra.mxu0 0.0
        %1191 = vmatprep.subr.mxu0 0.0
        %1192 = vmatpush1.msra.mxu0 0.0
        %1193 = vmatprep.subr.mxu0 0.0
        %1194 = vmatpush1.msra.mxu0 0.0
        %1195 = vmatprep.subr.mxu0 0.0
        %1196 = vmatpush1.msra.mxu0 0.0
        %1197 = vmatprep.subr.mxu0 0.0
        %1198 = vmatpush1.msra.mxu0 0.0
        %1199 = vmatprep.subr.mxu0 0.0
        %1200 = vmatpush1.msra.mxu0 0.0
        %1201 = vmatprep.subr.mxu0 0.0
        %1202 = vmatpush1.msra.mxu0 0.0
        %1203 = vmatprep.subr.mxu0 0.0
        %1204 = vmatpush1.msra.mxu0 0.0
        %1205 = vmatprep.subr.mxu0 0.0
        %1206 = vmatpush1.msra.mxu0 0.0
        %1207 = vmatprep.subr.mxu0 0.0
        %1208 = vmatpush1.msra.mxu0 0.0
        %1209 = vmatprep.subr.mxu0 0.0
        %1210 = vmatpush1.msra.mxu0 0.0
        %1211 = vmatprep.subr.mxu0 0.0
        %1212 = vmatpush1.msra.mxu0 0.0
        %1213 = vmatprep.subr.mxu0 0.0
        %1214 = vmatpush1.msra.mxu0 0.0
        %1215 = vmatprep.subr.mxu0 0.0
        %1216 = vmatpush1.msra.mxu0 0.0
        %1217 = vmatprep.subr.mxu0 0.0
        %1218 = vmatpush1.msra.mxu0 0.0
        %1219 = vmatprep.subr.mxu0 0.0
        %1220 = vmatpush1.msra.mxu0 0.0
        %1221 = vmatprep.subr.mxu0 0.0
        %1222 = vmatpush1.msra.mxu0 0.0
        %1223 = vmatprep.subr.mxu0 0.0
        %1224 = vmatpush1.msra.mxu0 0.0
        %1225 = vmatprep.subr.mxu0 0.0
        %1226 = vmatpush1.msra.mxu0 0.0
        %1227 = vmatprep.subr.mxu0 0.0
        %1228 = vmatpush1.msra.mxu0 0.0
        %1229 = vmatprep.subr.mxu0 0.0
        %1230 = vmatpush1.msra.mxu0 0.0
        %1231 = vmatprep.subr.mxu0 0.0
        %1232 = vmatpush1.msra.mxu0 0.0
        %1233 = vmatprep.subr.mxu0 0.0
        %1234 = vmatpush1.msra.mxu0 0.0
        %1235 = vmatprep.mubr.f32.mxu0 0.0
        %1236 = vmatmul.mubr.f32.gmra.mrb[0].mxu0 %v747
        %v1237 = vpop.f32.mrb[0].mxu0
        %v1238 = vadd.f32 %v745, %v1237
        %v1239 = vpop.f32.mrb[0].mxu0
        %1240 = vdwg.mxu0
        %1241 = vst.msk [vmem:[%s247 + $0x1] sm:$0x1] %vm822, %v1238
        %v1242 = vld [vmem:[%s252 + $0x8] sm:$0x7]
        %v1244 = vsel %vm325, %v1242, 0
        %1246 = vmatprep.subr.mxu0 0.0
        %1247 = vmatpush1.msra.mxu0 %v1244
        %1248 = vmatprep.subr.mxu0 0.0
        %1249 = vmatpush1.msra.mxu0 0.0
        %1250 = vmatprep.subr.mxu0 0.0
        %1251 = vmatpush1.msra.mxu0 0.0
        %1252 = vmatprep.subr.mxu0 0.0
        %1253 = vmatpush1.msra.mxu0 0.0
        %1254 = vmatprep.subr.mxu0 0.0
        %1255 = vmatpush1.msra.mxu0 0.0
        %1256 = vmatprep.subr.mxu0 0.0
        %1257 = vmatpush1.msra.mxu0 0.0
        %1258 = vmatprep.subr.mxu0 0.0
        %1259 = vmatpush1.msra.mxu0 0.0
        %1260 = vmatprep.subr.mxu0 0.0
        %1261 = vmatpush1.msra.mxu0 0.0
        %1262 = vmatprep.subr.mxu0 0.0
        %1263 = vmatpush1.msra.mxu0 0.0
        %1264 = vmatprep.subr.mxu0 0.0
        %1265 = vmatpush1.msra.mxu0 0.0
        %1266 = vmatprep.subr.mxu0 0.0
        %1267 = vmatpush1.msra.mxu0 0.0
        %1268 = vmatprep.subr.mxu0 0.0
        %1269 = vmatpush1.msra.mxu0 0.0
        %1270 = vmatprep.subr.mxu0 0.0
        %1271 = vmatpush1.msra.mxu0 0.0
        %1272 = vmatprep.subr.mxu0 0.0
        %1273 = vmatpush1.msra.mxu0 0.0
        %1274 = vmatprep.subr.mxu0 0.0
        %1275 = vmatpush1.msra.mxu0 0.0
        %1276 = vmatprep.subr.mxu0 0.0
        %1277 = vmatpush1.msra.mxu0 0.0
        %1278 = vmatprep.subr.mxu0 0.0
        %1279 = vmatpush1.msra.mxu0 0.0
        %1280 = vmatprep.subr.mxu0 0.0
        %1281 = vmatpush1.msra.mxu0 0.0
        %1282 = vmatprep.subr.mxu0 0.0
        %1283 = vmatpush1.msra.mxu0 0.0
        %1284 = vmatprep.subr.mxu0 0.0
        %1285 = vmatpush1.msra.mxu0 0.0
        %1286 = vmatprep.subr.mxu0 0.0
        %1287 = vmatpush1.msra.mxu0 0.0
        %1288 = vmatprep.subr.mxu0 0.0
        %1289 = vmatpush1.msra.mxu0 0.0
        %1290 = vmatprep.subr.mxu0 0.0
        %1291 = vmatpush1.msra.mxu0 0.0
        %1292 = vmatprep.subr.mxu0 0.0
        %1293 = vmatpush1.msra.mxu0 0.0
        %1294 = vmatprep.subr.mxu0 0.0
        %1295 = vmatpush1.msra.mxu0 0.0
        %1296 = vmatprep.subr.mxu0 0.0
        %1297 = vmatpush1.msra.mxu0 0.0
        %1298 = vmatprep.subr.mxu0 0.0
        %1299 = vmatpush1.msra.mxu0 0.0
        %1300 = vmatprep.subr.mxu0 0.0
        %1301 = vmatpush1.msra.mxu0 0.0
        %1302 = vmatprep.subr.mxu0 0.0
        %1303 = vmatpush1.msra.mxu0 0.0
        %1304 = vmatprep.subr.mxu0 0.0
        %1305 = vmatpush1.msra.mxu0 0.0
        %1306 = vmatprep.subr.mxu0 0.0
        %1307 = vmatpush1.msra.mxu0 0.0
        %1308 = vmatprep.subr.mxu0 0.0
        %1309 = vmatpush1.msra.mxu0 0.0
        %1310 = vmatprep.mubr.f32.mxu0 0.0
        %1311 = vmatmul.mubr.f32.gmra.mrb[0].mxu0 %v290
        %v1312 = vpop.f32.mrb[0].mxu0
        %v1313 = vadd.f32 0.0, %v1312
        %v1314 = vpop.f32.mrb[0].mxu0
        %1315 = vmatprep.mubr.f32.mxu0 0.0
        %1316 = vmatmul.mubr.f32.gmra.mrb[0].mxu0 %v293
        %v1317 = vpop.f32.mrb[0].mxu0
        %v1318 = vadd.f32 0.0, %v1317
        %v1319 = vpop.f32.mrb[0].mxu0
        %1320 = vmatprep.mubr.f32.mxu0 0.0
        %1321 = vmatmul.mubr.f32.gmra.mrb[0].mxu0 %v296
        %v1322 = vpop.f32.mrb[0].mxu0
        %v1323 = vadd.f32 0.0, %v1322
        %v1324 = vpop.f32.mrb[0].mxu0
        %1325 = vmatprep.mubr.f32.mxu0 0.0
        %1326 = vmatmul.mubr.f32.gmra.mrb[0].mxu0 %v299
        %v1327 = vpop.f32.mrb[0].mxu0
        %v1328 = vadd.f32 0.0, %v1327
        %v1329 = vpop.f32.mrb[0].mxu0
        %1330 = vmatprep.mubr.f32.mxu0 0.0
        %1331 = vmatmul.mubr.f32.gmra.mrb[0].mxu0 %v302
        %v1332 = vpop.f32.mrb[0].mxu0
        %v1333 = vadd.f32 0.0, %v1332
        %v1334 = vpop.f32.mrb[0].mxu0
        %1335 = vmatprep.mubr.f32.mxu0 0.0
        %1336 = vmatmul.mubr.f32.gmra.mrb[0].mxu0 %v305
        %v1337 = vpop.f32.mrb[0].mxu0
        %v1338 = vadd.f32 0.0, %v1337
        %v1339 = vpop.f32.mrb[0].mxu0
        %1340 = vmatprep.mubr.f32.mxu0 0.0
        %1341 = vmatmul.mubr.f32.gmra.mrb[0].mxu0 %v308
        %v1342 = vpop.f32.mrb[0].mxu0
        %v1343 = vadd.f32 0.0, %v1342
        %v1344 = vpop.f32.mrb[0].mxu0
        %1345 = vmatprep.mubr.f32.mxu0 0.0
        %1346 = vmatmul.mubr.f32.gmra.mrb[0].mxu0 %v311
        %v1347 = vpop.f32.mrb[0].mxu0
        %v1348 = vadd.f32 0.0, %v1347
        %v1349 = vpop.f32.mrb[0].mxu0
        %1350 = vmatprep.mubr.f32.mxu0 0.0
        %1351 = vmatmul.mubr.f32.gmra.mrb[0].mxu0 %v314
        %v1352 = vpop.f32.mrb[0].mxu0
        %v1353 = vadd.f32 0.0, %v1352
        %v1354 = vpop.f32.mrb[0].mxu0
        %1355 = vmatprep.mubr.f32.mxu0 0.0
        %1356 = vmatmul.mubr.f32.gmra.mrb[0].mxu0 %v317
        %v1357 = vpop.f32.mrb[0].mxu0
        %v1358 = vadd.f32 0.0, %v1357
        %v1359 = vpop.f32.mrb[0].mxu0
        %1360 = vmatprep.mubr.f32.mxu0 0.0
        %1361 = vmatmul.mubr.f32.gmra.mrb[0].mxu0 %v320
        %v1362 = vpop.f32.mrb[0].mxu0
        %v1363 = vadd.f32 0.0, %v1362
        %v1364 = vpop.f32.mrb[0].mxu0
        %1365 = vmatprep.mubr.f32.mxu0 0.0
        %1366 = vmatmul.mubr.f32.gmra.mrb[0].mxu0 %v323
        %v1367 = vpop.f32.mrb[0].mxu0
        %v1368 = vadd.f32 0.0, %v1367
        %v1369 = vpop.f32.mrb[0].mxu0
        %1370 = vdwg.mxu0
        %v1371 = vtanh.pop %v1313
        %v1372 = vtanh.pop %v1318
        %v1373 = vtanh.pop %v1323
        %v1374 = vtanh.pop %v1328
        %v1375 = vtanh.pop %v1333
        %v1376 = vtanh.pop %v1338
        %v1377 = vtanh.pop %v1343
        %v1378 = vtanh.pop %v1348
        %v1379 = vtanh.pop %v1353
        %v1380 = vtanh.pop %v1358
        %v1381 = vtanh.pop %v1363
        %v1382 = vtanh.pop %v1368
        %v1383 = vsub.f32 %v1375, %v1379
        %v1384 = vsub.f32 %v1376, %v1380
        %v1385 = vsub.f32 %v1377, %v1381
        %v1386 = vsub.f32 %v1378, %v1382
        %v1387 = vmul.f32 %v1371, %v1383
        %v1388 = vmul.f32 %v1372, %v1384
        %v1389 = vmul.f32 %v1373, %v1385
        %v1390 = vmul.f32 %v1374, %v1386
        %v1391 = vadd.f32 %v1379, %v1387
        %v1392 = vadd.f32 %v1380, %v1388
        %v1393 = vadd.f32 %v1381, %v1389
        %v1394 = vadd.f32 %v1382, %v1390
        %1395 = vmatprep.subr.mxu0 0.0
        %1396 = vmatpush1.msra.mxu0 %v1391
        %1397 = vmatprep.subr.mxu0 0.0
        %1398 = vmatpush1.msra.mxu0 %v1392
        %1399 = vmatprep.subr.mxu0 0.0
        %1400 = vmatpush1.msra.mxu0 %v1393
        %1401 = vmatprep.subr.mxu0 0.0
        %1402 = vmatpush1.msra.mxu0 %v1394
        %1403 = vmatprep.subr.mxu0 0.0
        %1404 = vmatpush1.msra.mxu0 0.0
        %1405 = vmatprep.subr.mxu0 0.0
        %1406 = vmatpush1.msra.mxu0 0.0
        %1407 = vmatprep.subr.mxu0 0.0
        %1408 = vmatpush1.msra.mxu0 0.0
        %1409 = vmatprep.subr.mxu0 0.0
        %1410 = vmatpush1.msra.mxu0 0.0
        %1411 = vmatprep.subr.mxu0 0.0
        %1412 = vmatpush1.msra.mxu0 0.0
        %1413 = vmatprep.subr.mxu0 0.0
        %1414 = vmatpush1.msra.mxu0 0.0
        %1415 = vmatprep.subr.mxu0 0.0
        %1416 = vmatpush1.msra.mxu0 0.0
        %1417 = vmatprep.subr.mxu0 0.0
        %1418 = vmatpush1.msra.mxu0 0.0
        %1419 = vmatprep.subr.mxu0 0.0
        %1420 = vmatpush1.msra.mxu0 0.0
        %1421 = vmatprep.subr.mxu0 0.0
        %1422 = vmatpush1.msra.mxu0 0.0
        %1423 = vmatprep.subr.mxu0 0.0
        %1424 = vmatpush1.msra.mxu0 0.0
        %1425 = vmatprep.subr.mxu0 0.0
        %1426 = vmatpush1.msra.mxu0 0.0
        %1427 = vmatprep.subr.mxu0 0.0
        %1428 = vmatpush1.msra.mxu0 0.0
        %1429 = vmatprep.subr.mxu0 0.0
        %1430 = vmatpush1.msra.mxu0 0.0
        %1431 = vmatprep.subr.mxu0 0.0
        %1432 = vmatpush1.msra.mxu0 0.0
        %1433 = vmatprep.subr.mxu0 0.0
        %1434 = vmatpush1.msra.mxu0 0.0
        %1435 = vmatprep.subr.mxu0 0.0
        %1436 = vmatpush1.msra.mxu0 0.0
        %1437 = vmatprep.subr.mxu0 0.0
        %1438 = vmatpush1.msra.mxu0 0.0
        %1439 = vmatprep.subr.mxu0 0.0
        %1440 = vmatpush1.msra.mxu0 0.0
        %1441 = vmatprep.subr.mxu0 0.0
        %1442 = vmatpush1.msra.mxu0 0.0
        %1443 = vmatprep.subr.mxu0 0.0
        %1444 = vmatpush1.msra.mxu0 0.0
        %1445 = vmatprep.subr.mxu0 0.0
        %1446 = vmatpush1.msra.mxu0 0.0
        %1447 = vmatprep.subr.mxu0 0.0
        %1448 = vmatpush1.msra.mxu0 0.0
        %1449 = vmatprep.subr.mxu0 0.0
        %1450 = vmatpush1.msra.mxu0 0.0
        %1451 = vmatprep.subr.mxu0 0.0
        %1452 = vmatpush1.msra.mxu0 0.0
        %1453 = vmatprep.subr.mxu0 0.0
        %1454 = vmatpush1.msra.mxu0 0.0
        %1455 = vmatprep.subr.mxu0 0.0
        %1456 = vmatpush1.msra.mxu0 0.0
        %1457 = vmatprep.subr.mxu0 0.0
        %1458 = vmatpush1.msra.mxu0 0.0
        %1459 = vmatprep.mubr.f32.mxu0 0.0
        %1460 = vmatmul.mubr.f32.gmra.mrb[0].mxu0 %v500
        %v1461 = vpop.f32.mrb[0].mxu0
        %v1462 = vadd.f32 %v481, %v1461
        %v1463 = vpop.f32.mrb[0].mxu0
        %1464 = vmatprep.mubr.f32.mxu0 0.0
        %1465 = vmatmul.mubr.f32.gmra.mrb[0].mxu0 %v503
        %v1466 = vpop.f32.mrb[0].mxu0
        %v1467 = vadd.f32 %v486, %v1466
        %v1468 = vpop.f32.mrb[0].mxu0
        %1469 = vmatprep.mubr.f32.mxu0 0.0
        %1470 = vmatmul.mubr.f32.gmra.mrb[0].mxu0 %v506
        %v1471 = vpop.f32.mrb[0].mxu0
        %v1472 = vadd.f32 %v491, %v1471
        %v1473 = vpop.f32.mrb[0].mxu0
        %1474 = vmatprep.mubr.f32.mxu0 0.0
        %1475 = vmatmul.mubr.f32.gmra.mrb[0].mxu0 %v509
        %v1476 = vpop.f32.mrb[0].mxu0
        %v1477 = vadd.f32 %v496, %v1476
        %v1478 = vpop.f32.mrb[0].mxu0
        %1479 = vdwg.mxu0
        %v1480 = vtanh.pop %v1462
        %v1481 = vtanh.pop %v1467
        %v1482 = vtanh.pop %v1472
        %v1483 = vtanh.pop %v1477
        %v1484 = vmul.f32 %v1480, %v1383
        %v1485 = vmul.f32 %v1481, %v1384
        %v1486 = vmul.f32 %v1482, %v1385
        %v1487 = vmul.f32 %v1483, %v1386
        %v1488 = vadd.f32 %v1379, %v1484
        %v1489 = vadd.f32 %v1380, %v1485
        %v1490 = vadd.f32 %v1381, %v1486
        %v1491 = vadd.f32 %v1382, %v1487
        %1492 = vmatprep.subr.mxu0 0.0
        %1493 = vmatpush1.msra.mxu0 %v1488
        %1494 = vmatprep.subr.mxu0 0.0
        %1495 = vmatpush1.msra.mxu0 %v1489
        %1496 = vmatprep.subr.mxu0 0.0
        %1497 = vmatpush1.msra.mxu0 %v1490
        %1498 = vmatprep.subr.mxu0 0.0
        %1499 = vmatpush1.msra.mxu0 %v1491
        %1500 = vmatprep.subr.mxu0 0.0
        %1501 = vmatpush1.msra.mxu0 0.0
        %1502 = vmatprep.subr.mxu0 0.0
        %1503 = vmatpush1.msra.mxu0 0.0
        %1504 = vmatprep.subr.mxu0 0.0
        %1505 = vmatpush1.msra.mxu0 0.0
        %1506 = vmatprep.subr.mxu0 0.0
        %1507 = vmatpush1.msra.mxu0 0.0
        %1508 = vmatprep.subr.mxu0 0.0
        %1509 = vmatpush1.msra.mxu0 0.0
        %1510 = vmatprep.subr.mxu0 0.0
        %1511 = vmatpush1.msra.mxu0 0.0
        %1512 = vmatprep.subr.mxu0 0.0
        %1513 = vmatpush1.msra.mxu0 0.0
        %1514 = vmatprep.subr.mxu0 0.0
        %1515 = vmatpush1.msra.mxu0 0.0
        %1516 = vmatprep.subr.mxu0 0.0
        %1517 = vmatpush1.msra.mxu0 0.0
        %1518 = vmatprep.subr.mxu0 0.0
        %1519 = vmatpush1.msra.mxu0 0.0
        %1520 = vmatprep.subr.mxu0 0.0
        %1521 = vmatpush1.msra.mxu0 0.0
        %1522 = vmatprep.subr.mxu0 0.0
        %1523 = vmatpush1.msra.mxu0 0.0
        %1524 = vmatprep.subr.mxu0 0.0
        %1525 = vmatpush1.msra.mxu0 0.0
        %1526 = vmatprep.subr.mxu0 0.0
        %1527 = vmatpush1.msra.mxu0 0.0
        %1528 = vmatprep.subr.mxu0 0.0
        %1529 = vmatpush1.msra.mxu0 0.0
        %1530 = vmatprep.subr.mxu0 0.0
        %1531 = vmatpush1.msra.mxu0 0.0
        %1532 = vmatprep.subr.mxu0 0.0
        %1533 = vmatpush1.msra.mxu0 0.0
        %1534 = vmatprep.subr.mxu0 0.0
        %1535 = vmatpush1.msra.mxu0 0.0
        %1536 = vmatprep.subr.mxu0 0.0
        %1537 = vmatpush1.msra.mxu0 0.0
        %1538 = vmatprep.subr.mxu0 0.0
        %1539 = vmatpush1.msra.mxu0 0.0
        %1540 = vmatprep.subr.mxu0 0.0
        %1541 = vmatpush1.msra.mxu0 0.0
        %1542 = vmatprep.subr.mxu0 0.0
        %1543 = vmatpush1.msra.mxu0 0.0
        %1544 = vmatprep.subr.mxu0 0.0
        %1545 = vmatpush1.msra.mxu0 0.0
        %1546 = vmatprep.subr.mxu0 0.0
        %1547 = vmatpush1.msra.mxu0 0.0
        %1548 = vmatprep.subr.mxu0 0.0
        %1549 = vmatpush1.msra.mxu0 0.0
        %1550 = vmatprep.subr.mxu0 0.0
        %1551 = vmatpush1.msra.mxu0 0.0
        %1552 = vmatprep.subr.mxu0 0.0
        %1553 = vmatpush1.msra.mxu0 0.0
        %1554 = vmatprep.subr.mxu0 0.0
        %1555 = vmatpush1.msra.mxu0 0.0
        %1556 = vmatprep.mubr.f32.mxu0 0.0
        %1557 = vmatmul.mubr.f32.gmra.mrb[0].mxu0 %v629
        %v1558 = vpop.f32.mrb[0].mxu0
        %v1559 = vadd.f32 %v611, %v1558
        %v1560 = vpop.f32.mrb[0].mxu0
        %1561 = vmatprep.mubr.f32.mxu0 0.0
        %1562 = vmatmul.mubr.f32.gmra.mrb[0].mxu0 %v632
        %v1563 = vpop.f32.mrb[0].mxu0
        %v1564 = vadd.f32 %v616, %v1563
        %v1565 = vpop.f32.mrb[0].mxu0
        %1566 = vmatprep.mubr.f32.mxu0 0.0
        %1567 = vmatmul.mubr.f32.gmra.mrb[0].mxu0 %v635
        %v1568 = vpop.f32.mrb[0].mxu0
        %v1569 = vadd.f32 %v621, %v1568
        %v1570 = vpop.f32.mrb[0].mxu0
        %1571 = vmatprep.mubr.f32.mxu0 0.0
        %1572 = vmatmul.mubr.f32.gmra.mrb[0].mxu0 %v638
        %v1573 = vpop.f32.mrb[0].mxu0
        %v1574 = vadd.f32 %v626, %v1573
        %v1575 = vpop.f32.mrb[0].mxu0
        %1576 = vdwg.mxu0
        %v1577 = vtanh.pop %v1559
        %v1578 = vtanh.pop %v1564
        %v1579 = vtanh.pop %v1569
        %v1580 = vtanh.pop %v1574
        %v1581 = vmul.f32 %v1577, %v1383
        %v1582 = vmul.f32 %v1578, %v1384
        %v1583 = vmul.f32 %v1579, %v1385
        %v1584 = vmul.f32 %v1580, %v1386
        %v1585 = vadd.f32 %v1379, %v1581
        %v1586 = vadd.f32 %v1380, %v1582
        %v1587 = vadd.f32 %v1381, %v1583
        %v1588 = vadd.f32 %v1382, %v1584
        %1589 = vmatprep.subr.mxu0 0.0
        %1590 = vmatpush1.msra.mxu0 %v1585
        %1591 = vmatprep.subr.mxu0 0.0
        %1592 = vmatpush1.msra.mxu0 %v1586
        %1593 = vmatprep.subr.mxu0 0.0
        %1594 = vmatpush1.msra.mxu0 %v1587
        %1595 = vmatprep.subr.mxu0 0.0
        %1596 = vmatpush1.msra.mxu0 %v1588
        %1597 = vmatprep.subr.mxu0 0.0
        %1598 = vmatpush1.msra.mxu0 0.0
        %1599 = vmatprep.subr.mxu0 0.0
        %1600 = vmatpush1.msra.mxu0 0.0
        %1601 = vmatprep.subr.mxu0 0.0
        %1602 = vmatpush1.msra.mxu0 0.0
        %1603 = vmatprep.subr.mxu0 0.0
        %1604 = vmatpush1.msra.mxu0 0.0
        %1605 = vmatprep.subr.mxu0 0.0
        %1606 = vmatpush1.msra.mxu0 0.0
        %1607 = vmatprep.subr.mxu0 0.0
        %1608 = vmatpush1.msra.mxu0 0.0
        %1609 = vmatprep.subr.mxu0 0.0
        %1610 = vmatpush1.msra.mxu0 0.0
        %1611 = vmatprep.subr.mxu0 0.0
        %1612 = vmatpush1.msra.mxu0 0.0
        %1613 = vmatprep.subr.mxu0 0.0
        %1614 = vmatpush1.msra.mxu0 0.0
        %1615 = vmatprep.subr.mxu0 0.0
        %1616 = vmatpush1.msra.mxu0 0.0
        %1617 = vmatprep.subr.mxu0 0.0
        %1618 = vmatpush1.msra.mxu0 0.0
        %1619 = vmatprep.subr.mxu0 0.0
        %1620 = vmatpush1.msra.mxu0 0.0
        %1621 = vmatprep.subr.mxu0 0.0
        %1622 = vmatpush1.msra.mxu0 0.0
        %1623 = vmatprep.subr.mxu0 0.0
        %1624 = vmatpush1.msra.mxu0 0.0
        %1625 = vmatprep.subr.mxu0 0.0
        %1626 = vmatpush1.msra.mxu0 0.0
        %1627 = vmatprep.subr.mxu0 0.0
        %1628 = vmatpush1.msra.mxu0 0.0
        %1629 = vmatprep.subr.mxu0 0.0
        %1630 = vmatpush1.msra.mxu0 0.0
        %1631 = vmatprep.subr.mxu0 0.0
        %1632 = vmatpush1.msra.mxu0 0.0
        %1633 = vmatprep.subr.mxu0 0.0
        %1634 = vmatpush1.msra.mxu0 0.0
        %1635 = vmatprep.subr.mxu0 0.0
        %1636 = vmatpush1.msra.mxu0 0.0
        %1637 = vmatprep.subr.mxu0 0.0
        %1638 = vmatpush1.msra.mxu0 0.0
        %1639 = vmatprep.subr.mxu0 0.0
        %1640 = vmatpush1.msra.mxu0 0.0
        %1641 = vmatprep.subr.mxu0 0.0
        %1642 = vmatpush1.msra.mxu0 0.0
        %1643 = vmatprep.subr.mxu0 0.0
        %1644 = vmatpush1.msra.mxu0 0.0
        %1645 = vmatprep.subr.mxu0 0.0
        %1646 = vmatpush1.msra.mxu0 0.0
        %1647 = vmatprep.subr.mxu0 0.0
        %1648 = vmatpush1.msra.mxu0 0.0
        %1649 = vmatprep.subr.mxu0 0.0
        %1650 = vmatpush1.msra.mxu0 0.0
        %1651 = vmatprep.subr.mxu0 0.0
        %1652 = vmatpush1.msra.mxu0 0.0
        %1653 = vmatprep.mubr.f32.mxu0 0.0
        %1654 = vmatmul.mubr.f32.gmra.mrb[0].mxu0 %v747
        %v1655 = vpop.f32.mrb[0].mxu0
        %v1656 = vadd.f32 %v745, %v1655
        %v1657 = vpop.f32.mrb[0].mxu0
        %1658 = vdwg.mxu0
        %1659 = vst.msk [vmem:[%s247 + $0x2] sm:$0x1] %vm822, %v1656
        %v1660 = vld [vmem:[%s252 + $0xc] sm:$0x7]
        %v1662 = vsel %vm325, %v1660, 0
        %1664 = vmatprep.subr.mxu0 0.0
        %1665 = vmatpush1.msra.mxu0 %v1662
        %1666 = vmatprep.subr.mxu0 0.0
        %1667 = vmatpush1.msra.mxu0 0.0
        %1668 = vmatprep.subr.mxu0 0.0
        %1669 = vmatpush1.msra.mxu0 0.0
        %1670 = vmatprep.subr.mxu0 0.0
        %1671 = vmatpush1.msra.mxu0 0.0
        %1672 = vmatprep.subr.mxu0 0.0
        %1673 = vmatpush1.msra.mxu0 0.0
        %1674 = vmatprep.subr.mxu0 0.0
        %1675 = vmatpush1.msra.mxu0 0.0
        %1676 = vmatprep.subr.mxu0 0.0
        %1677 = vmatpush1.msra.mxu0 0.0
        %1678 = vmatprep.subr.mxu0 0.0
        %1679 = vmatpush1.msra.mxu0 0.0
        %1680 = vmatprep.subr.mxu0 0.0
        %1681 = vmatpush1.msra.mxu0 0.0
        %1682 = vmatprep.subr.mxu0 0.0
        %1683 = vmatpush1.msra.mxu0 0.0
        %1684 = vmatprep.subr.mxu0 0.0
        %1685 = vmatpush1.msra.mxu0 0.0
        %1686 = vmatprep.subr.mxu0 0.0
        %1687 = vmatpush1.msra.mxu0 0.0
        %1688 = vmatprep.subr.mxu0 0.0
        %1689 = vmatpush1.msra.mxu0 0.0
        %1690 = vmatprep.subr.mxu0 0.0
        %1691 = vmatpush1.msra.mxu0 0.0
        %1692 = vmatprep.subr.mxu0 0.0
        %1693 = vmatpush1.msra.mxu0 0.0
        %1694 = vmatprep.subr.mxu0 0.0
        %1695 = vmatpush1.msra.mxu0 0.0
        %1696 = vmatprep.subr.mxu0 0.0
        %1697 = vmatpush1.msra.mxu0 0.0
        %1698 = vmatprep.subr.mxu0 0.0
        %1699 = vmatpush1.msra.mxu0 0.0
        %1700 = vmatprep.subr.mxu0 0.0
        %1701 = vmatpush1.msra.mxu0 0.0
        %1702 = vmatprep.subr.mxu0 0.0
        %1703 = vmatpush1.msra.mxu0 0.0
        %1704 = vmatprep.subr.mxu0 0.0
        %1705 = vmatpush1.msra.mxu0 0.0
        %1706 = vmatprep.subr.mxu0 0.0
        %1707 = vmatpush1.msra.mxu0 0.0
        %1708 = vmatprep.subr.mxu0 0.0
        %1709 = vmatpush1.msra.mxu0 0.0
        %1710 = vmatprep.subr.mxu0 0.0
        %1711 = vmatpush1.msra.mxu0 0.0
        %1712 = vmatprep.subr.mxu0 0.0
        %1713 = vmatpush1.msra.mxu0 0.0
        %1714 = vmatprep.subr.mxu0 0.0
        %1715 = vmatpush1.msra.mxu0 0.0
        %1716 = vmatprep.subr.mxu0 0.0
        %1717 = vmatpush1.msra.mxu0 0.0
        %1718 = vmatprep.subr.mxu0 0.0
        %1719 = vmatpush1.msra.mxu0 0.0
        %1720 = vmatprep.subr.mxu0 0.0
        %1721 = vmatpush1.msra.mxu0 0.0
        %1722 = vmatprep.subr.mxu0 0.0
        %1723 = vmatpush1.msra.mxu0 0.0
        %1724 = vmatprep.subr.mxu0 0.0
        %1725 = vmatpush1.msra.mxu0 0.0
        %1726 = vmatprep.subr.mxu0 0.0
        %1727 = vmatpush1.msra.mxu0 0.0
        %1728 = vmatprep.mubr.f32.mxu0 0.0
        %1729 = vmatmul.mubr.f32.gmra.mrb[0].mxu0 %v290
        %v1730 = vpop.f32.mrb[0].mxu0
        %v1731 = vadd.f32 0.0, %v1730
        %v1732 = vpop.f32.mrb[0].mxu0
        %1733 = vmatprep.mubr.f32.mxu0 0.0
        %1734 = vmatmul.mubr.f32.gmra.mrb[0].mxu0 %v293
        %v1735 = vpop.f32.mrb[0].mxu0
        %v1736 = vadd.f32 0.0, %v1735
        %v1737 = vpop.f32.mrb[0].mxu0
        %1738 = vmatprep.mubr.f32.mxu0 0.0
        %1739 = vmatmul.mubr.f32.gmra.mrb[0].mxu0 %v296
        %v1740 = vpop.f32.mrb[0].mxu0
        %v1741 = vadd.f32 0.0, %v1740
        %v1742 = vpop.f32.mrb[0].mxu0
        %1743 = vmatprep.mubr.f32.mxu0 0.0
        %1744 = vmatmul.mubr.f32.gmra.mrb[0].mxu0 %v299
        %v1745 = vpop.f32.mrb[0].mxu0
        %v1746 = vadd.f32 0.0, %v1745
        %v1747 = vpop.f32.mrb[0].mxu0
        %1748 = vmatprep.mubr.f32.mxu0 0.0
        %1749 = vmatmul.mubr.f32.gmra.mrb[0].mxu0 %v302
        %v1750 = vpop.f32.mrb[0].mxu0
        %v1751 = vadd.f32 0.0, %v1750
        %v1752 = vpop.f32.mrb[0].mxu0
        %1753 = vmatprep.mubr.f32.mxu0 0.0
        %1754 = vmatmul.mubr.f32.gmra.mrb[0].mxu0 %v305
        %v1755 = vpop.f32.mrb[0].mxu0
        %v1756 = vadd.f32 0.0, %v1755
        %v1757 = vpop.f32.mrb[0].mxu0
        %1758 = vmatprep.mubr.f32.mxu0 0.0
        %1759 = vmatmul.mubr.f32.gmra.mrb[0].mxu0 %v308
        %v1760 = vpop.f32.mrb[0].mxu0
        %v1761 = vadd.f32 0.0, %v1760
        %v1762 = vpop.f32.mrb[0].mxu0
        %1763 = vmatprep.mubr.f32.mxu0 0.0
        %1764 = vmatmul.mubr.f32.gmra.mrb[0].mxu0 %v311
        %v1765 = vpop.f32.mrb[0].mxu0
        %v1766 = vadd.f32 0.0, %v1765
        %v1767 = vpop.f32.mrb[0].mxu0
        %1768 = vmatprep.mubr.f32.mxu0 0.0
        %1769 = vmatmul.mubr.f32.gmra.mrb[0].mxu0 %v314
        %v1770 = vpop.f32.mrb[0].mxu0
        %v1771 = vadd.f32 0.0, %v1770
        %v1772 = vpop.f32.mrb[0].mxu0
        %1773 = vmatprep.mubr.f32.mxu0 0.0
        %1774 = vmatmul.mubr.f32.gmra.mrb[0].mxu0 %v317
        %v1775 = vpop.f32.mrb[0].mxu0
        %v1776 = vadd.f32 0.0, %v1775
        %v1777 = vpop.f32.mrb[0].mxu0
        %1778 = vmatprep.mubr.f32.mxu0 0.0
        %1779 = vmatmul.mubr.f32.gmra.mrb[0].mxu0 %v320
        %v1780 = vpop.f32.mrb[0].mxu0
        %v1781 = vadd.f32 0.0, %v1780
        %v1782 = vpop.f32.mrb[0].mxu0
        %1783 = vmatprep.mubr.f32.mxu0 0.0
        %1784 = vmatmul.mubr.f32.gmra.mrb[0].mxu0 %v323
        %v1785 = vpop.f32.mrb[0].mxu0
        %v1786 = vadd.f32 0.0, %v1785
        %v1787 = vpop.f32.mrb[0].mxu0
        %1788 = vdwg.mxu0
        %v1789 = vtanh.pop %v1731
        %v1790 = vtanh.pop %v1736
        %v1791 = vtanh.pop %v1741
        %v1792 = vtanh.pop %v1746
        %v1793 = vtanh.pop %v1751
        %v1794 = vtanh.pop %v1756
        %v1795 = vtanh.pop %v1761
        %v1796 = vtanh.pop %v1766
        %v1797 = vtanh.pop %v1771
        %v1798 = vtanh.pop %v1776
        %v1799 = vtanh.pop %v1781
        %v1800 = vtanh.pop %v1786
        %v1801 = vsub.f32 %v1793, %v1797
        %v1802 = vsub.f32 %v1794, %v1798
        %v1803 = vsub.f32 %v1795, %v1799
        %v1804 = vsub.f32 %v1796, %v1800
        %v1805 = vmul.f32 %v1789, %v1801
        %v1806 = vmul.f32 %v1790, %v1802
        %v1807 = vmul.f32 %v1791, %v1803
        %v1808 = vmul.f32 %v1792, %v1804
        %v1809 = vadd.f32 %v1797, %v1805
        %v1810 = vadd.f32 %v1798, %v1806
        %v1811 = vadd.f32 %v1799, %v1807
        %v1812 = vadd.f32 %v1800, %v1808
        %1813 = vmatprep.subr.mxu0 0.0
        %1814 = vmatpush1.msra.mxu0 %v1809
        %1815 = vmatprep.subr.mxu0 0.0
        %1816 = vmatpush1.msra.mxu0 %v1810
        %1817 = vmatprep.subr.mxu0 0.0
        %1818 = vmatpush1.msra.mxu0 %v1811
        %1819 = vmatprep.subr.mxu0 0.0
        %1820 = vmatpush1.msra.mxu0 %v1812
        %1821 = vmatprep.subr.mxu0 0.0
        %1822 = vmatpush1.msra.mxu0 0.0
        %1823 = vmatprep.subr.mxu0 0.0
        %1824 = vmatpush1.msra.mxu0 0.0
        %1825 = vmatprep.subr.mxu0 0.0
        %1826 = vmatpush1.msra.mxu0 0.0
        %1827 = vmatprep.subr.mxu0 0.0
        %1828 = vmatpush1.msra.mxu0 0.0
        %1829 = vmatprep.subr.mxu0 0.0
        %1830 = vmatpush1.msra.mxu0 0.0
        %1831 = vmatprep.subr.mxu0 0.0
        %1832 = vmatpush1.msra.mxu0 0.0
        %1833 = vmatprep.subr.mxu0 0.0
        %1834 = vmatpush1.msra.mxu0 0.0
        %1835 = vmatprep.subr.mxu0 0.0
        %1836 = vmatpush1.msra.mxu0 0.0
        %1837 = vmatprep.subr.mxu0 0.0
        %1838 = vmatpush1.msra.mxu0 0.0
        %1839 = vmatprep.subr.mxu0 0.0
        %1840 = vmatpush1.msra.mxu0 0.0
        %1841 = vmatprep.subr.mxu0 0.0
        %1842 = vmatpush1.msra.mxu0 0.0
        %1843 = vmatprep.subr.mxu0 0.0
        %1844 = vmatpush1.msra.mxu0 0.0
        %1845 = vmatprep.subr.mxu0 0.0
        %1846 = vmatpush1.msra.mxu0 0.0
        %1847 = vmatprep.subr.mxu0 0.0
        %1848 = vmatpush1.msra.mxu0 0.0
        %1849 = vmatprep.subr.mxu0 0.0
        %1850 = vmatpush1.msra.mxu0 0.0
        %1851 = vmatprep.subr.mxu0 0.0
        %1852 = vmatpush1.msra.mxu0 0.0
        %1853 = vmatprep.subr.mxu0 0.0
        %1854 = vmatpush1.msra.mxu0 0.0
        %1855 = vmatprep.subr.mxu0 0.0
        %1856 = vmatpush1.msra.mxu0 0.0
        %1857 = vmatprep.subr.mxu0 0.0
        %1858 = vmatpush1.msra.mxu0 0.0
        %1859 = vmatprep.subr.mxu0 0.0
        %1860 = vmatpush1.msra.mxu0 0.0
        %1861 = vmatprep.subr.mxu0 0.0
        %1862 = vmatpush1.msra.mxu0 0.0
        %1863 = vmatprep.subr.mxu0 0.0
        %1864 = vmatpush1.msra.mxu0 0.0
        %1865 = vmatprep.subr.mxu0 0.0
        %1866 = vmatpush1.msra.mxu0 0.0
        %1867 = vmatprep.subr.mxu0 0.0
        %1868 = vmatpush1.msra.mxu0 0.0
        %1869 = vmatprep.subr.mxu0 0.0
        %1870 = vmatpush1.msra.mxu0 0.0
        %1871 = vmatprep.subr.mxu0 0.0
        %1872 = vmatpush1.msra.mxu0 0.0
        %1873 = vmatprep.subr.mxu0 0.0
        %1874 = vmatpush1.msra.mxu0 0.0
        %1875 = vmatprep.subr.mxu0 0.0
        %1876 = vmatpush1.msra.mxu0 0.0
        %1877 = vmatprep.mubr.f32.mxu0 0.0
        %1878 = vmatmul.mubr.f32.gmra.mrb[0].mxu0 %v500
        %v1879 = vpop.f32.mrb[0].mxu0
        %v1880 = vadd.f32 %v481, %v1879
        %v1881 = vpop.f32.mrb[0].mxu0
        %1882 = vmatprep.mubr.f32.mxu0 0.0
        %1883 = vmatmul.mubr.f32.gmra.mrb[0].mxu0 %v503
        %v1884 = vpop.f32.mrb[0].mxu0
        %v1885 = vadd.f32 %v486, %v1884
        %v1886 = vpop.f32.mrb[0].mxu0
        %1887 = vmatprep.mubr.f32.mxu0 0.0
        %1888 = vmatmul.mubr.f32.gmra.mrb[0].mxu0 %v506
        %v1889 = vpop.f32.mrb[0].mxu0
        %v1890 = vadd.f32 %v491, %v1889
        %v1891 = vpop.f32.mrb[0].mxu0
        %1892 = vmatprep.mubr.f32.mxu0 0.0
        %1893 = vmatmul.mubr.f32.gmra.mrb[0].mxu0 %v509
        %v1894 = vpop.f32.mrb[0].mxu0
        %v1895 = vadd.f32 %v496, %v1894
        %v1896 = vpop.f32.mrb[0].mxu0
        %1897 = vdwg.mxu0
        %v1898 = vtanh.pop %v1880
        %v1899 = vtanh.pop %v1885
        %v1900 = vtanh.pop %v1890
        %v1901 = vtanh.pop %v1895
        %v1902 = vmul.f32 %v1898, %v1801
        %v1903 = vmul.f32 %v1899, %v1802
        %v1904 = vmul.f32 %v1900, %v1803
        %v1905 = vmul.f32 %v1901, %v1804
        %v1906 = vadd.f32 %v1797, %v1902
        %v1907 = vadd.f32 %v1798, %v1903
        %v1908 = vadd.f32 %v1799, %v1904
        %v1909 = vadd.f32 %v1800, %v1905
        %1910 = vmatprep.subr.mxu0 0.0
        %1911 = vmatpush1.msra.mxu0 %v1906
        %1912 = vmatprep.subr.mxu0 0.0
        %1913 = vmatpush1.msra.mxu0 %v1907
        %1914 = vmatprep.subr.mxu0 0.0
        %1915 = vmatpush1.msra.mxu0 %v1908
        %1916 = vmatprep.subr.mxu0 0.0
        %1917 = vmatpush1.msra.mxu0 %v1909
        %1918 = vmatprep.subr.mxu0 0.0
        %1919 = vmatpush1.msra.mxu0 0.0
        %1920 = vmatprep.subr.mxu0 0.0
        %1921 = vmatpush1.msra.mxu0 0.0
        %1922 = vmatprep.subr.mxu0 0.0
        %1923 = vmatpush1.msra.mxu0 0.0
        %1924 = vmatprep.subr.mxu0 0.0
        %1925 = vmatpush1.msra.mxu0 0.0
        %1926 = vmatprep.subr.mxu0 0.0
        %1927 = vmatpush1.msra.mxu0 0.0
        %1928 = vmatprep.subr.mxu0 0.0
        %1929 = vmatpush1.msra.mxu0 0.0
        %1930 = vmatprep.subr.mxu0 0.0
        %1931 = vmatpush1.msra.mxu0 0.0
        %1932 = vmatprep.subr.mxu0 0.0
        %1933 = vmatpush1.msra.mxu0 0.0
        %1934 = vmatprep.subr.mxu0 0.0
        %1935 = vmatpush1.msra.mxu0 0.0
        %1936 = vmatprep.subr.mxu0 0.0
        %1937 = vmatpush1.msra.mxu0 0.0
        %1938 = vmatprep.subr.mxu0 0.0
        %1939 = vmatpush1.msra.mxu0 0.0
        %1940 = vmatprep.subr.mxu0 0.0
        %1941 = vmatpush1.msra.mxu0 0.0
        %1942 = vmatprep.subr.mxu0 0.0
        %1943 = vmatpush1.msra.mxu0 0.0
        %1944 = vmatprep.subr.mxu0 0.0
        %1945 = vmatpush1.msra.mxu0 0.0
        %1946 = vmatprep.subr.mxu0 0.0
        %1947 = vmatpush1.msra.mxu0 0.0
        %1948 = vmatprep.subr.mxu0 0.0
        %1949 = vmatpush1.msra.mxu0 0.0
        %1950 = vmatprep.subr.mxu0 0.0
        %1951 = vmatpush1.msra.mxu0 0.0
        %1952 = vmatprep.subr.mxu0 0.0
        %1953 = vmatpush1.msra.mxu0 0.0
        %1954 = vmatprep.subr.mxu0 0.0
        %1955 = vmatpush1.msra.mxu0 0.0
        %1956 = vmatprep.subr.mxu0 0.0
        %1957 = vmatpush1.msra.mxu0 0.0
        %1958 = vmatprep.subr.mxu0 0.0
        %1959 = vmatpush1.msra.mxu0 0.0
        %1960 = vmatprep.subr.mxu0 0.0
        %1961 = vmatpush1.msra.mxu0 0.0
        %1962 = vmatprep.subr.mxu0 0.0
        %1963 = vmatpush1.msra.mxu0 0.0
        %1964 = vmatprep.subr.mxu0 0.0
        %1965 = vmatpush1.msra.mxu0 0.0
        %1966 = vmatprep.subr.mxu0 0.0
        %1967 = vmatpush1.msra.mxu0 0.0
        %1968 = vmatprep.subr.mxu0 0.0
        %1969 = vmatpush1.msra.mxu0 0.0
        %1970 = vmatprep.subr.mxu0 0.0
        %1971 = vmatpush1.msra.mxu0 0.0
        %1972 = vmatprep.subr.mxu0 0.0
        %1973 = vmatpush1.msra.mxu0 0.0
        %1974 = vmatprep.mubr.f32.mxu0 0.0
        %1975 = vmatmul.mubr.f32.gmra.mrb[0].mxu0 %v629
        %v1976 = vpop.f32.mrb[0].mxu0
        %v1977 = vadd.f32 %v611, %v1976
        %v1978 = vpop.f32.mrb[0].mxu0
        %1979 = vmatprep.mubr.f32.mxu0 0.0
        %1980 = vmatmul.mubr.f32.gmra.mrb[0].mxu0 %v632
        %v1981 = vpop.f32.mrb[0].mxu0
        %v1982 = vadd.f32 %v616, %v1981
        %v1983 = vpop.f32.mrb[0].mxu0
        %1984 = vmatprep.mubr.f32.mxu0 0.0
        %1985 = vmatmul.mubr.f32.gmra.mrb[0].mxu0 %v635
        %v1986 = vpop.f32.mrb[0].mxu0
        %v1987 = vadd.f32 %v621, %v1986
        %v1988 = vpop.f32.mrb[0].mxu0
        %1989 = vmatprep.mubr.f32.mxu0 0.0
        %1990 = vmatmul.mubr.f32.gmra.mrb[0].mxu0 %v638
        %v1991 = vpop.f32.mrb[0].mxu0
        %v1992 = vadd.f32 %v626, %v1991
        %v1993 = vpop.f32.mrb[0].mxu0
        %1994 = vdwg.mxu0
        %v1995 = vtanh.pop %v1977
        %v1996 = vtanh.pop %v1982
        %v1997 = vtanh.pop %v1987
        %v1998 = vtanh.pop %v1992
        %v1999 = vmul.f32 %v1995, %v1801
        %v2000 = vmul.f32 %v1996, %v1802
        %v2001 = vmul.f32 %v1997, %v1803
        %v2002 = vmul.f32 %v1998, %v1804
        %v2003 = vadd.f32 %v1797, %v1999
        %v2004 = vadd.f32 %v1798, %v2000
        %v2005 = vadd.f32 %v1799, %v2001
        %v2006 = vadd.f32 %v1800, %v2002
        %2007 = vmatprep.subr.mxu0 0.0
        %2008 = vmatpush1.msra.mxu0 %v2003
        %2009 = vmatprep.subr.mxu0 0.0
        %2010 = vmatpush1.msra.mxu0 %v2004
        %2011 = vmatprep.subr.mxu0 0.0
        %2012 = vmatpush1.msra.mxu0 %v2005
        %2013 = vmatprep.subr.mxu0 0.0
        %2014 = vmatpush1.msra.mxu0 %v2006
        %2015 = vmatprep.subr.mxu0 0.0
        %2016 = vmatpush1.msra.mxu0 0.0
        %2017 = vmatprep.subr.mxu0 0.0
        %2018 = vmatpush1.msra.mxu0 0.0
        %2019 = vmatprep.subr.mxu0 0.0
        %2020 = vmatpush1.msra.mxu0 0.0
        %2021 = vmatprep.subr.mxu0 0.0
        %2022 = vmatpush1.msra.mxu0 0.0
        %2023 = vmatprep.subr.mxu0 0.0
        %2024 = vmatpush1.msra.mxu0 0.0
        %2025 = vmatprep.subr.mxu0 0.0
        %2026 = vmatpush1.msra.mxu0 0.0
        %2027 = vmatprep.subr.mxu0 0.0
        %2028 = vmatpush1.msra.mxu0 0.0
        %2029 = vmatprep.subr.mxu0 0.0
        %2030 = vmatpush1.msra.mxu0 0.0
        %2031 = vmatprep.subr.mxu0 0.0
        %2032 = vmatpush1.msra.mxu0 0.0
        %2033 = vmatprep.subr.mxu0 0.0
        %2034 = vmatpush1.msra.mxu0 0.0
        %2035 = vmatprep.subr.mxu0 0.0
        %2036 = vmatpush1.msra.mxu0 0.0
        %2037 = vmatprep.subr.mxu0 0.0
        %2038 = vmatpush1.msra.mxu0 0.0
        %2039 = vmatprep.subr.mxu0 0.0
        %2040 = vmatpush1.msra.mxu0 0.0
        %2041 = vmatprep.subr.mxu0 0.0
        %2042 = vmatpush1.msra.mxu0 0.0
        %2043 = vmatprep.subr.mxu0 0.0
        %2044 = vmatpush1.msra.mxu0 0.0
        %2045 = vmatprep.subr.mxu0 0.0
        %2046 = vmatpush1.msra.mxu0 0.0
        %2047 = vmatprep.subr.mxu0 0.0
        %2048 = vmatpush1.msra.mxu0 0.0
        %2049 = vmatprep.subr.mxu0 0.0
        %2050 = vmatpush1.msra.mxu0 0.0
        %2051 = vmatprep.subr.mxu0 0.0
        %2052 = vmatpush1.msra.mxu0 0.0
        %2053 = vmatprep.subr.mxu0 0.0
        %2054 = vmatpush1.msra.mxu0 0.0
        %2055 = vmatprep.subr.mxu0 0.0
        %2056 = vmatpush1.msra.mxu0 0.0
        %2057 = vmatprep.subr.mxu0 0.0
        %2058 = vmatpush1.msra.mxu0 0.0
        %2059 = vmatprep.subr.mxu0 0.0
        %2060 = vmatpush1.msra.mxu0 0.0
        %2061 = vmatprep.subr.mxu0 0.0
        %2062 = vmatpush1.msra.mxu0 0.0
        %2063 = vmatprep.subr.mxu0 0.0
        %2064 = vmatpush1.msra.mxu0 0.0
        %2065 = vmatprep.subr.mxu0 0.0
        %2066 = vmatpush1.msra.mxu0 0.0
        %2067 = vmatprep.subr.mxu0 0.0
        %2068 = vmatpush1.msra.mxu0 0.0
        %2069 = vmatprep.subr.mxu0 0.0
        %2070 = vmatpush1.msra.mxu0 0.0
        %2071 = vmatprep.mubr.f32.mxu0 0.0
        %2072 = vmatmul.mubr.f32.gmra.mrb[0].mxu0 %v747
        %v2073 = vpop.f32.mrb[0].mxu0
        %v2074 = vadd.f32 %v745, %v2073
        %v2075 = vpop.f32.mrb[0].mxu0
        %2076 = vdwg.mxu0
        %2077 = vst.msk [vmem:[%s247 + $0x3] sm:$0x1] %vm822, %v2074
        %s2078 = sand.u32 %s161, 1
        %s2079 = scalar_lea.sflag [#allocation4], %s2078
        %s2080 = sand.u32 %s161, 1
        %s2081 = smul.addr %s2080, 4
        %s2082 = scalar_lea.vmem [#allocation3], %s2081
        // Predicated region
        $region45: #{net_attention.1} parent=43 // pred_check
          %p2083 = pneg %p171
        $region46: #{net_attention.1} parent=43 // pred_check_branch
          %2085 = sbr.rel (%p2083) target = $region48
        $region47: #{net_attention.1} parent=43 // pred_region
          %s2086 = smul.u32 4, %s22
          %s2088 = ssub.s32 64, 64
          %2089 = vsyncadd %s2079, %s2088
          %s2090 = smul.addr %s2086, 16
          %s2091 = scalar_lea.hbm %s6, %s2090
          %s2093 = sshll.u32 %s2082, 4
          %s2094 = int_to_ptr.vmem [resolvable:$true] %s2093
          %2096 = dma.vmem_to_hbm [thread:$0]  %s2094, 64, %s2091, %s2079
        $region48: #{net_attention.1} parent=43 // pred_fallthru
          _
      $region44: #{net_attention.1} parent=5 // pred_fallthru
        _
      %p2097 = scmp.le.s32.totalorder 2, %s17
      // Predicated region
      $region49: #{net_attention.1} parent=5 // pred_check
        %p2098 = pneg %p2097
      $region50: #{net_attention.1} parent=5 // pred_check_branch
        %2100 = sbr.rel (%p2098) target = $region52
      $region51: #{net_attention.1} parent=5 // pred_region
        %s2101 = ssub.s32 %s17, 2
        // Predicated region
        $region53: #{net_attention.1} parent=51 // pred_check
          %p2102 = pneg %p177
        $region54: #{net_attention.1} parent=51 // pred_check_branch
          %2104 = sbr.rel (%p2102) target = $region56
        $region55: #{net_attention.1} parent=51 // pred_region
          %s2105 = sand.u32 %s162, 1
          %s2106 = scalar_lea.sflag [#allocation4], %s2105
          %s2107 = sand.u32 %s162, 1
          %s2108 = smul.addr %s2107, 4
          %s2109 = scalar_lea.vmem [#allocation3], %s2108
          %2110 = dma.done %s2106, 64
        $region56: #{net_attention.1} parent=51 // pred_fallthru
          _
      $region52: #{net_attention.1} parent=5 // pred_fallthru
        _
    $region6: #{net_attention.1} parent=1 // loop_footer
      %s21 = sadd.s32 1, %s17
    $region7: #{net_attention.1} parent=1 // loop_footer_branch
      %16 = sbr.rel target = $region3
    $region8: #{net_attention.1} parent=1 // loop_exit
      _
    %2111 = vsyncpa [#allocation4], 1
    %s2112 = scalar_lea.sflag [#allocation4], 1
    %2113 = vsyncpa %s2112, 1

</llo_original>
